<compile_context>
chip_gen: v7x
topology: tpu7x:2x2x1
jax: 0.10.0
libtpu: 0.0.40
codegen_flags: <defaults>
</compile_context>

<pallas_src>
import math
import functools
from typing import NamedTuple

import numpy as np
import jax
import jax.numpy as jnp
from jax.experimental import pallas as pl
from jax.experimental.pallas import tpu as pltpu


# ----------------------------------------------------------------------------
# Geometry preprocessing (plain numpy, deterministic) — "parameter setup" glue.
# ----------------------------------------------------------------------------

def _icosahedron():
    t = (1.0 + math.sqrt(5.0)) / 2.0
    verts = np.array(
        [[-1, t, 0], [1, t, 0], [-1, -t, 0], [1, -t, 0],
         [0, -1, t], [0, 1, t], [0, -1, -t], [0, 1, -t],
         [t, 0, -1], [t, 0, 1], [-t, 0, -1], [-t, 0, 1]], dtype=np.float64)
    verts /= np.linalg.norm(verts, axis=1, keepdims=True)
    faces = np.array(
        [[0, 11, 5], [0, 5, 1], [0, 1, 7], [0, 7, 10], [0, 10, 11],
         [1, 5, 9], [5, 11, 4], [11, 10, 2], [10, 7, 6], [7, 1, 8],
         [3, 9, 4], [3, 4, 2], [3, 2, 6], [3, 6, 8], [3, 8, 9],
         [4, 9, 5], [2, 4, 11], [6, 2, 10], [8, 6, 7], [9, 8, 1]],
        dtype=np.int64)
    return verts, faces


def _subdivide(verts, faces):
    verts = [v for v in verts]
    edge_cache = {}

    def midpoint(a, b):
        key = (min(a, b), max(a, b))
        if key not in edge_cache:
            m = (verts[a] + verts[b]) / 2.0
            m = m / np.linalg.norm(m)
            edge_cache[key] = len(verts)
            verts.append(m)
        return edge_cache[key]

    new_faces = []
    for (a, b, c) in faces:
        ab, bc, ca = midpoint(a, b), midpoint(b, c), midpoint(c, a)
        new_faces += [[a, ab, ca], [b, bc, ab], [c, ca, bc], [ab, bc, ca]]
    return np.stack(verts), np.array(new_faces, dtype=np.int64)


def generate_icosphere(order=0):
    """Returns (vertices, faces) of a unit icosphere with `order` subdivisions."""
    v, f = _icosahedron()
    for _ in range(order):
        v, f = _subdivide(v, f)
    return v, f


def _angular_resolution(verts, faces):
    # TODO(synk): exact PyMesh `get_angular_resolution` formula unavailable here;
    # we use the mean angular edge length of the icosphere as the resolution.
    edges = set()
    for (a, b, c) in faces:
        for e in ((a, b), (b, c), (c, a)):
            edges.add((min(e), max(e)))
    edges = np.array(sorted(edges), dtype=np.int64)
    dots = np.clip(np.sum(verts[edges[:, 0]] * verts[edges[:, 1]], axis=-1), -1.0, 1.0)
    return float(np.mean(np.arccos(dots)))


def compute_num_samples(base_order, sample_order, kernel_size=None):
    num_samples = 2 ** (sample_order - base_order)
    if kernel_size is not None:
        num_samples += 2 * (kernel_size // 2)
    return num_samples


def get_sampling_resolution(base_order):
    if base_order < 5:
        v, f = generate_icosphere(max(0, base_order - 1))
        sampling_resolution = _angular_resolution(v, f)
        if base_order == 0:
            sampling_resolution *= 2
    else:
        v, f = generate_icosphere(4)
        sampling_resolution = _angular_resolution(v, f)
        sampling_resolution /= 2 ** (base_order - 5)
    return sampling_resolution


def convert_3d_to_spherical(xyz):
    r = np.linalg.norm(xyz, axis=-1)
    lon = np.arctan2(xyz[..., 1], xyz[..., 0])
    lat = np.arcsin(np.clip(xyz[..., 2] / r, -1.0, 1.0))
    return np.stack((lon, lat), axis=-1)


def gnomonic_kernel(spherical_coords, kh, kw, res_lat, res_lon):
    lon = spherical_coords[..., 0]
    lat = spherical_coords[..., 1]
    num_samples = spherical_coords.shape[0]
    x = np.zeros(kh * kw)
    y = np.zeros(kh * kw)
    for i in range(kh):
        cur_i = i - kh // 2
        for j in range(kw):
            cur_j = j - kw // 2
            x[i * kw + j] = cur_j * res_lon
            y[i * kw + j] = cur_i * res_lat
    if kh % 2 == 0:
        y += res_lat / 2
    if kw % 2 == 0:
        x += res_lon / 2
    lat = lat.reshape(1, num_samples, 1)
    lon = lon.reshape(1, num_samples, 1)
    x = x.reshape(1, 1, kh * kw)
    y = y.reshape(1, 1, kh * kw)
    rho = np.sqrt(x ** 2 + y ** 2)
    nu = np.arctan(rho)
    rho_safe = np.where(rho == 0.0, 1.0, rho)
    out_lat = np.arcsin(np.clip(
        np.cos(nu) * np.sin(lat) + y * np.sin(nu) * np.cos(lat) / rho_safe, -1.0, 1.0))
    out_lon = lon + np.arctan2(
        x * np.sin(nu),
        rho * np.cos(lat) * np.cos(nu) - y * np.sin(lat) * np.sin(nu))
    if kh % 2 == 1:
        out_lat[..., [kh // 2 * kw + kw // 2]] = lat
    if kw % 2 == 1:
        out_lon[..., [kh // 2 * kw + kw // 2]] = lon
    out_lon = (out_lon + math.pi) % (2 * math.pi) - math.pi
    return np.stack((out_lon, out_lat), -1)


def gnomonic_kernel_from_sphere(icosphere, kh, kw, res_lat, res_lon, source='face'):
    verts, faces = icosphere
    if source == 'face':
        centers = verts[faces].mean(axis=1)          # face barycenters
        spherical_coords = convert_3d_to_spherical(centers)
    elif source == 'vertex':
        spherical_coords = convert_3d_to_spherical(verts)
    else:
        raise ValueError('Invalid source ({})'.format(source))
    return gnomonic_kernel(spherical_coords, kh, kw, res_lat, res_lon)


def tangent_images_spherical_sample_map(base_order, sample_order, kernel_size=None):
    assert sample_order >= base_order
    base_sphere = generate_icosphere(base_order)
    sampling_resolution = get_sampling_resolution(base_order)
    num_samples = compute_num_samples(base_order, sample_order)
    num_samples_with_pad = compute_num_samples(base_order, sample_order, kernel_size)
    return gnomonic_kernel_from_sphere(
        base_sphere, num_samples_with_pad, num_samples_with_pad,
        sampling_resolution / num_samples, sampling_resolution / num_samples,
        source='face')


def convert_spherical_to_image(rad, image_shape):
    H, W = image_shape
    xy = np.zeros_like(rad)
    xy[..., 0] = (rad[..., 0] / (2 * math.pi) + 0.5) * (W - 1)
    xy[..., 1] = (rad[..., 1] / math.pi + 0.5) * (H - 1)
    return xy


def equirectangular_to_tangent_images_resample_map(image_shape, base_order,
                                                   sample_order, kernel_size=None):
    assert sample_order >= base_order
    spherical_sample_map = tangent_images_spherical_sample_map(
        base_order, sample_order, kernel_size)
    image_sample_map = convert_spherical_to_image(spherical_sample_map, image_shape)
    return np.squeeze(image_sample_map, axis=0)      # (F, P*P, 2)


def build_interp_matrix(sample_map, H, W):
    """Bispherical (bilinear, lon-wrap / lat-clamp) interpolation as a dense
    matrix M of shape (F*P*P, H*W) with 4 nonzeros per row."""
    F_, S, _ = sample_map.shape
    M = np.zeros((F_ * S, H * W), dtype=np.float32)
    sx = sample_map[..., 0].reshape(-1)
    sy = sample_map[..., 1].reshape(-1)
    x0 = np.floor(sx)
    y0 = np.floor(sy)
    wx = (sx - x0).astype(np.float32)
    wy = (sy - y0).astype(np.float32)
    x0 = x0.astype(np.int64)
    y0 = y0.astype(np.int64)
    x1, y1 = x0 + 1, y0 + 1
    x0m, x1m = np.mod(x0, W), np.mod(x1, W)          # longitude wraps
    y0c, y1c = np.clip(y0, 0, H - 1), np.clip(y1, 0, H - 1)  # latitude clamps
    rows = np.arange(F_ * S)
    np.add.at(M, (rows, y0c * W + x0m), (1 - wx) * (1 - wy))
    np.add.at(M, (rows, y0c * W + x1m), wx * (1 - wy))
    np.add.at(M, (rows, y1c * W + x0m), (1 - wx) * wy)
    np.add.at(M, (rows, y1c * W + x1m), wx * wy)
    return M


# ----------------------------------------------------------------------------
# Tiling helpers, chip detection & build-time operand preparation.
# ----------------------------------------------------------------------------

def _round_up(x, m):
    return ((x + m - 1) // m) * m


def _tpu_vmem_and_gen():
    """(vmem_capacity_bytes, is_v7x) with conservative fallbacks."""
    vmem_cap = 64 * 1024 * 1024          # conservative default (v7x-sized)
    is_v7x = False
    try:
        info = pltpu.get_tpu_info()
        cap = getattr(info, "vmem_capacity_bytes", None)
        if cap:
            vmem_cap = int(cap)
    except Exception:
        pass
    try:
        kind = jax.devices()[0].device_kind.lower()
        is_v7x = ("v7" in kind) or ("7x" in kind)
    except Exception:
        pass
    return max(vmem_cap, 32 * 1024 * 1024), is_v7x


def _choose_kn_tiles(K, N, is_v7x):
    # K tile: multiple of 128, up to 1024 (2-4 MiB B slabs amortize per-step cost).
    tk = min(_round_up(K, 128), 1024)
    n128 = _round_up(N, 128)
    tn = min(n128, 2048)
    # v7x has 2 TensorCores: ensure >= 2 parallel N blocks so the 'parallel' j
    # axis can shard across both. On 1-TC v5e/v6e this only adds grid steps.
    if is_v7x and (n128 // tn) < 2 and n128 >= 256:
        tn = _round_up(n128 // 2, 128)
    return tk, tn


class InterpOperand(NamedTuple):
    b_padded: jax.Array   # (Kp, Np) bfloat16, pre-transposed + zero-padded
    kmap: jax.Array       # (num_nt, max_nk) int32: nonzero K-tile ids per N-tile
    kcounts: jax.Array    # (num_nt,) int32: #nonzero K-tiles per N-tile
    K: int                # true H*W
    N: int                # true F*P*P
    tk: int
    tn: int
    num_faces: int
    grid_dim: int
    vmem_cap: int
    nnz_tiles: int        # sum(kcounts): total nonzero (tk x tn) B slabs


def build_resample_operand(image_shape, base_order, sample_order, kernel_size=1):
    """Build-time preparation (numpy, once): sample map -> dense interp matrix,
    transposed, padded to tile multiples, cast to bf16, plus the per-N-tile
    nonzero K-tile map used for block-sparse K skipping."""
    H, W = image_shape
    sample_map = equirectangular_to_tangent_images_resample_map(
        image_shape, base_order, sample_order, kernel_size)        # (F, P*P, 2)
    P = compute_num_samples(base_order, sample_order, kernel_size)
    F_ = sample_map.shape[0]
    K = H * W
    N = F_ * P * P

    vmem_cap, is_v7x = _tpu_vmem_and_gen()
    tk, tn = _choose_kn_tiles(K, N, is_v7x)
    Kp = _round_up(K, tk)
    Np = _round_up(N, tn)

    M_dense = build_interp_matrix(sample_map, H, W)                 # (N, K) f32
    b_np = np.zeros((Kp, Np), dtype=np.float32)
    b_np[:K, :N] = M_dense.T                                        # (K, N)

    # Block-sparsity map: which (tk x tn) slabs of B are nonzero, per N-tile.
    num_kt = Kp // tk
    num_nt = Np // tn
    nz = np.abs(b_np).reshape(num_kt, tk, num_nt, tn).sum(axis=(1, 3)) > 0
    counts = nz.sum(axis=0).astype(np.int32)                        # (num_nt,)
    max_nk = int(max(int(counts.max()), 1))
    kmap = np.zeros((num_nt, max_nk), dtype=np.int32)
    for j in range(num_nt):
        ks = np.flatnonzero(nz[:, j])
        if ks.size == 0:                                            # cannot happen
            ks = np.array([0], dtype=np.int64)
        kmap[j, :ks.size] = ks
        kmap[j, ks.size:] = ks[-1]        # repeat last valid idx -> no extra DMA
    counts = np.maximum(counts, 1)

    # TODO(synk): optionally quantize B to int8 (one global scale) / fp8 on v7x
    # to halve the dominant HBM stream; kept bf16 here for precision parity.
    b_padded = jnp.asarray(b_np).astype(jnp.bfloat16)

    op = InterpOperand(
        b_padded=b_padded,
        kmap=jnp.asarray(kmap),
        kcounts=jnp.asarray(counts),
        K=K, N=N, tk=tk, tn=tn,
        num_faces=F_, grid_dim=P,
        vmem_cap=int(vmem_cap),
        nnz_tiles=int(counts.sum()))
    return op, sample_map


# ----------------------------------------------------------------------------
# Pallas TPU kernels (bf16 inputs, f32 accumulation directly into the output).
# ----------------------------------------------------------------------------

def _mm_kernel_sparse_resident(kmap_ref, nk_ref, a_ref, b_ref, o_ref, *, tk):
    # A row-panel (tm, Kp) stays resident in VMEM; the K chunk is sliced
    # in-kernel at the block index given by the nonzero-tile map.
    j = pl.program_id(1)
    k = pl.program_id(2)

    @pl.when(k == 0)
    def _():
        o_ref[...] = jnp.zeros_like(o_ref)

    @pl.when(k < nk_ref[j])
    def _():
        kstart = pl.multiple_of(kmap_ref[j, k] * tk, tk)
        o_ref[...] += jnp.dot(a_ref[:, pl.ds(kstart, tk)], b_ref[...],
                              preferred_element_type=jnp.float32)


def _mm_kernel_sparse_streamed(kmap_ref, nk_ref, a_ref, b_ref, o_ref):
    # Both A and B streamed as (tm, tk)/(tk, tn) blocks; the BlockSpec index
    # maps already point at the nonzero K tiles only.
    j = pl.program_id(1)
    k = pl.program_id(2)

    @pl.when(k == 0)
    def _():
        o_ref[...] = jnp.zeros_like(o_ref)

    @pl.when(k < nk_ref[j])
    def _():
        o_ref[...] += jnp.dot(a_ref[...], b_ref[...],
                              preferred_element_type=jnp.float32)


@functools.partial(jax.jit,
                   static_argnames=("N", "tk", "tn", "vmem_cap", "nnz_tiles"))
def _matmul_pallas(a, b_padded, kmap, kcounts, *, N, tk, tn, vmem_cap, nnz_tiles):
    """a: (M, K) float.  b_padded: (Kp, Np) bf16, pre-padded.  Returns (M, N) f32.
    kmap/kcounts describe the nonzero (tk x tn) slabs of b_padded per N-tile."""
    M, K = a.shape
    Kp, Np = b_padded.shape
    num_nt, max_nk = kmap.shape

    # bf16 LHS -> tm multiple of 16 (sublane packing). Larger tm => fewer full
    # re-streams of B (B's index_map is independent of i).
    tm = min(_round_up(max(M, 1), 16), 512)
    Mp = _round_up(M, tm)
    mi = Mp // tm
    nj = Np // tn

    a_b = a if a.dtype == jnp.bfloat16 else a.astype(jnp.bfloat16)
    if (Mp != M) or (Kp != K):
        a_b = jnp.pad(a_b, ((0, Mp - M), (0, Kp - K)))

    # Keep the whole A row-panel resident in VMEM when it fits comfortably:
    # ~16 MiB on 128 MiB v5e/v6e, ~8 MiB on 64 MiB v7x.
    a_resident = (tm * Kp * 2) <= max(8 * 1024 * 1024, vmem_cap // 8)

    if a_resident:
        in_specs = [
            pl.BlockSpec((tm, Kp), lambda i, j, k, km, nk: (i, 0)),
            pl.BlockSpec((tk, tn), lambda i, j, k, km, nk: (km[j, k], j)),
        ]
        kernel = functools.partial(_mm_kernel_sparse_resident, tk=tk)
        a_tile_bytes = tm * Kp * 2
        a_total_bytes = Mp * Kp * 2
    else:
        in_specs = [
            pl.BlockSpec((tm, tk), lambda i, j, k, km, nk: (i, km[j, k])),
            pl.BlockSpec((tk, tn), lambda i, j, k, km, nk: (km[j, k], j)),
        ]
        kernel = _mm_kernel_sparse_streamed
        a_tile_bytes = tm * tk * 2
        a_total_bytes = mi * nnz_tiles * a_tile_bytes
    out_specs = pl.BlockSpec((tm, tn), lambda i, j, k, km, nk: (i, j))

    b_tile_bytes = tk * tn * 2
    o_tile_bytes = tm * tn * 4
    vmem_need = 2 * (a_tile_bytes + b_tile_bytes + o_tile_bytes)
    vmem_limit = int(min(max(2 * vmem_need, 32 * 1024 * 1024),
                         (vmem_cap * 3) // 4))

    cost = pl.CostEstimate(
        flops=2 * Mp * tk * tn * nnz_tiles,
        transcendentals=0,
        bytes_accessed=int(mi * nnz_tiles * b_tile_bytes
                           + a_total_bytes + Mp * Np * 4))

    out = pl.pallas_call(
        kernel,
        out_shape=jax.ShapeDtypeStruct((Mp, Np), jnp.float32),
        grid_spec=pltpu.PrefetchScalarGridSpec(
            num_scalar_prefetch=2,
            grid=(mi, nj, max_nk),
            in_specs=in_specs,
            out_specs=out_specs),
        compiler_params=pltpu.CompilerParams(
            dimension_semantics=("parallel", "parallel", "arbitrary"),
            vmem_limit_bytes=vmem_limit),
        cost_estimate=cost,
    )(kmap, kcounts, a_b, b_padded)

    if (Mp != M) or (Np != N):
        out = out[:M, :N]
    return out


def resample_to_uv_texture(x, op: InterpOperand):
    """x: (B, C, H, W) NCHW.  Returns (B, C, F, P, P), matching the PyTorch module."""
    B, C, H, W = x.shape
    assert H * W == op.K, (H * W, op.K)
    a = x.reshape(B * C, op.K)                                        # (BC, HW)
    out = _matmul_pallas(a, op.b_padded, op.kmap, op.kcounts,
                         N=op.N, tk=op.tk, tn=op.tn,
                         vmem_cap=op.vmem_cap, nnz_tiles=op.nnz_tiles)
    return out.reshape(B, C, op.num_faces, op.grid_dim, op.grid_dim)


# ----------------------------------------------------------------------------
# Pure numpy reference (direct bilinear gather) used for a correctness check.
# ----------------------------------------------------------------------------

def reference_unresample_np(x_np, sample_map, H, W, num_faces, P):
    B, C = x_np.shape[:2]
    sx = sample_map[..., 0].reshape(-1)
    sy = sample_map[..., 1].reshape(-1)
    x0 = np.floor(sx).astype(np.int64)
    y0 = np.floor(sy).astype(np.int64)
    wx = sx - x0
    wy = sy - y0
    x1, y1 = x0 + 1, y0 + 1
    x0m, x1m = np.mod(x0, W), np.mod(x1, W)
    y0c, y1c = np.clip(y0, 0, H - 1), np.clip(y1, 0, H - 1)
    img = x_np
    out = ((1 - wx) * (1 - wy) * img[..., y0c, x0m]
           + wx * (1 - wy) * img[..., y0c, x1m]
           + (1 - wx) * wy * img[..., y1c, x0m]
           + wx * wy * img[..., y1c, x1m])
    return out.reshape(B, C, num_faces, P, P)


if __name__ == "__main__":
    # Small, module-consistent configuration.
    image_shape = (16, 32)          # (H, W) equirectangular image
    base_order, sample_order, kernel_size = 0, 3, 1
    B, C = 2, 4
    H, W = image_shape

    # Build-time: sample map (the module's registered buffer) + prepared
    # bf16/pre-padded interpolation operand + block-sparse tile map.
    op, sample_map = build_resample_operand(
        image_shape, base_order, sample_order, kernel_size)
    F_ = op.num_faces                # 20 faces at order 0
    P = op.grid_dim                  # 2**(3-0) + 2*(1//2) = 8

    key = jax.random.PRNGKey(0)
    x = jax.random.normal(key, (B, C, H, W), dtype=jnp.float32)

    out = resample_to_uv_texture(x, op)
    out = jax.block_until_ready(out)
    assert out.shape == (B, C, F_, P, P), out.shape

    ref = reference_unresample_np(np.asarray(x), sample_map, H, W, F_, P)
    if not np.allclose(np.asarray(out), ref, atol=3e-2, rtol=3e-2):
        raise AssertionError("Pallas kernel output mismatch vs. bilinear reference")

    print("KERNEL_OK")
</pallas_src>

<mosaic_0001>
module attributes {stable_mosaic.version = 11 : i64} {
  func.func @_mm_kernel_sparse_resident(%arg0: i32, %arg1: i32, %arg2: i32, %arg3: memref<1x1xi32, #tpu.memory_space<smem>>, %arg4: memref<1xi32, #tpu.memory_space<smem>>, %arg5: memref<16x512xbf16, #tpu.memory_space<vmem>>, %arg6: memref<512x1280xbf16, #tpu.memory_space<vmem>>, %arg7: memref<16x1280xf32, #tpu.memory_space<vmem>>) attributes {dimension_semantics = [#tpu.dimension_semantics<parallel>, #tpu.dimension_semantics<parallel>, #tpu.dimension_semantics<arbitrary>], iteration_bounds = array<i64: 1, 1, 1>, scalar_prefetch = 2 : i64, scratch_operands = 0 : i64, tpu.core_type = #tpu.core_type<tc>, window_params = [{transform_indices = @transform_0, window_bounds = array<i64: 16, 512>}, {transform_indices = @transform_1, window_bounds = array<i64: 512, 1280>}, {transform_indices = @transform_2, window_bounds = array<i64: 16, 1280>}]} {
    %c0_i32 = arith.constant 0 : i32
    %0 = arith.cmpi eq, %arg2, %c0_i32 : i32
    %1 = arith.extui %0 : i1 to i32
    %c0_i32_0 = arith.constant 0 : i32
    %2 = arith.cmpi ne, %1, %c0_i32_0 : i32
    scf.if %2 {
      %cst = arith.constant 0.000000e+00 : f32
      %8 = vector.broadcast %cst : f32 to vector<16x1280xf32>
      %c0 = arith.constant 0 : index
      %c0_2 = arith.constant 0 : index
      %9 = vector.load %arg7[%c0, %c0_2] : memref<16x1280xf32, #tpu.memory_space<vmem>>, vector<16x1280xf32>
      tpu.vector_store %arg7[%c0, %c0_2], %8 {strides = array<i32>} : memref<16x1280xf32, #tpu.memory_space<vmem>>, vector<16x1280xf32>,
    } else {
    }
    %3 = arith.index_cast %arg1 : i32 to index
    %4 = memref.load %arg4[%3] : memref<1xi32, #tpu.memory_space<smem>>
    %5 = arith.cmpi slt, %arg2, %4 : i32
    %6 = arith.extui %5 : i1 to i32
    %c0_i32_1 = arith.constant 0 : i32
    %7 = arith.cmpi ne, %6, %c0_i32_1 : i32
    scf.if %7 {
      %8 = arith.index_cast %arg1 : i32 to index
      %9 = arith.index_cast %arg2 : i32 to index
      %10 = memref.load %arg3[%8, %9] : memref<1x1xi32, #tpu.memory_space<smem>>
      %c512_i32 = arith.constant 512 : i32
      %11 = arith.muli %10, %c512_i32 : i32
      %12 = tpu.assume_multiple %11, 512 : i32
      %c0 = arith.constant 0 : index
      %c0_2 = arith.constant 0 : index
      %13 = vector.load %arg7[%c0, %c0_2] : memref<16x1280xf32, #tpu.memory_space<vmem>>, vector<16x1280xf32>
      %c0_3 = arith.constant 0 : index
      %14 = arith.index_cast %12 : i32 to index
      %15 = vector.load %arg5[%c0_3, %14] : memref<16x512xbf16, #tpu.memory_space<vmem>>, vector<16x512xbf16>
      %c0_4 = arith.constant 0 : index
      %c0_5 = arith.constant 0 : index
      %16 = vector.load %arg6[%c0_4, %c0_5] : memref<512x1280xbf16, #tpu.memory_space<vmem>>, vector<512x1280xbf16>
      %cst = arith.constant dense<0.000000e+00> : vector<16x1280xf32>
      %17 = tpu.matmul %15, %16, %cst {dimension_numbers = #tpu.dot_dimension_numbers<[1], [0], [0], [1], [0, 0, 1, 1], [], []>} : vector<16x512xbf16>, vector<512x1280xbf16>, vector<16x1280xf32> -> vector<16x1280xf32>
      %18 = arith.addf %13, %17 : vector<16x1280xf32>
      %c0_6 = arith.constant 0 : index
      %c0_7 = arith.constant 0 : index
      %19 = vector.load %arg7[%c0_6, %c0_7] : memref<16x1280xf32, #tpu.memory_space<vmem>>, vector<16x1280xf32>
      tpu.vector_store %arg7[%c0_6, %c0_7], %18 {strides = array<i32>} : memref<16x1280xf32, #tpu.memory_space<vmem>>, vector<16x1280xf32>,
    } else {
    }
    return
  }
  func.func @transform_0(%arg0: i32, %arg1: i32, %arg2: i32, %arg3: memref<1x1xi32, #tpu.memory_space<smem>>, %arg4: memref<1xi32, #tpu.memory_space<smem>>) -> (i32, i32) {
    %c0_i32 = arith.constant 0 : i32
    %c0_i32_0 = arith.constant 0 : i32
    return %arg0, %c0_i32 : i32, i32
  }
  func.func @transform_1(%arg0: i32, %arg1: i32, %arg2: i32, %arg3: memref<1x1xi32, #tpu.memory_space<smem>>, %arg4: memref<1xi32, #tpu.memory_space<smem>>) -> (i32, i32) {
    %0 = arith.index_cast %arg1 : i32 to index
    %1 = arith.index_cast %arg2 : i32 to index
    %2 = memref.load %arg3[%0, %1] : memref<1x1xi32, #tpu.memory_space<smem>>
    %c0_i32 = arith.constant 0 : i32
    return %2, %arg1 : i32, i32
  }
  func.func @transform_2(%arg0: i32, %arg1: i32, %arg2: i32, %arg3: memref<1x1xi32, #tpu.memory_space<smem>>, %arg4: memref<1xi32, #tpu.memory_space<smem>>) -> (i32, i32) {
    %c0_i32 = arith.constant 0 : i32
    return %arg0, %arg1 : i32, i32
  }
}

</mosaic_0001>

<llo_original>
// kernel: _matmul_pallas.1
$region0: #{_matmul_pallas.1}
  #allocation0 [shape = 'u32[]', space=smem, size = 0x4, offset = 0x4, fixed_abs, tag = 'smem constant byte address 0x4 - core index']
  #allocation1 [shape = 'u32[144,128]{1,0:T(1,128)}', space=vmem, size = 0x12000, scoped, tag = 'internal scratch']
  #allocation2 [shape = 's32[1]{0}', space=sflag, size = 0x4, scoped, tag = 'scoped memory for _matmul_pallas.1']
  #allocation3 [shape = 's32[1,1]{1,0:T(1,128)S(6)}', space=smem, size = 0x200, scoped, tag = 'prefetched SMEM operand 0']
  #allocation4 [shape = 's32[1]{0:T(128)S(6)}', space=smem, size = 0x200, scoped, tag = 'prefetched SMEM operand 1']
  %s0 = inlined_call_operand.<no memory space> [shape: s32[1,1], index: 0, kind: input, shape index: {}]
  %s1 = inlined_call_operand.<no memory space> [shape: s32[1], index: 1, kind: input, shape index: {}]
  %s2 = inlined_call_operand.vmem [shape: bf16[16,512], index: 2, kind: input, shape index: {}]
  %s3 = inlined_call_operand.hbm [shape: bf16[512,1280], index: 3, kind: input, shape index: {}]
  %s4 = inlined_call_operand.vmem [shape: f32[16,1280], index: 4, kind: output, shape index: {}]
  %s5 = sld [smem:[#allocation0]]
  $region30: #{_matmul_pallas.1} parent=0
    _
  %s7 = ssub.s32 1, %s5
  %s8 = scalar_select 0, %s7, %s5
  %9 = sst [smem:[#allocation3]] %s0
  %10 = sst [smem:[#allocation4]] %s1
  $region1: #{_matmul_pallas.1} parent=0
    #allocation5 [shape = 'u8[1310720]{0}', space=vmem, size = 0x140000, scoped, tag = 'input window, operand 3, single buffered']
    #allocation6 [shape = 's32[1]{0}', space=sflag, size = 0x4, scoped, tag = 'scoped memory for _matmul_pallas.1']
    %11 = vsyncpa [#allocation6], 0
    // Predicated region
    $region2: #{_matmul_pallas.1} parent=1 // pred_check
      _
    $region3: #{_matmul_pallas.1} parent=1 // pred_check_branch
      %13 = sbr.rel (0) target = $region5
    $region4: #{_matmul_pallas.1} parent=1 // pred_region
      _
    $region5: #{_matmul_pallas.1} parent=1 // pred_fallthru
      _
    // Predicated region
    $region6: #{_matmul_pallas.1} parent=1 // pred_check
      _
    $region7: #{_matmul_pallas.1} parent=1 // pred_check_branch
      %15 = sbr.rel (0) target = $region9
    $region8: #{_matmul_pallas.1} parent=1 // pred_region
      %s16 = sadd.s32 0, 0
      %s17 = smul.u32 %s16, 128
      %s18 = sadd.s32 %s17, 0
      %s19 = sld [smem:[#allocation3 + %s18]]
      %s20 = smul.u32 64, %s19
      %s22 = ssub.s32 40960, 40960
      %23 = vsyncadd [#allocation6], %s22
      %s24 = smul.addr %s20, 10
      %s25 = smul.addr %s24, 64
      %s26 = scalar_lea.hbm %s3, %s25
      %s27 = sshll.u32 [#allocation5], 4
      %s28 = int_to_ptr.vmem [resolvable:$true] %s27
      %33 = dma.hbm_to_vmem [thread:$0]  %s26, 40960, %s28, [#allocation6], 640, 640, 40
    $region9: #{_matmul_pallas.1} parent=1 // pred_fallthru
      _
    // Predicated region
    $region10: #{_matmul_pallas.1} parent=1 // pred_check
      _
    $region11: #{_matmul_pallas.1} parent=1 // pred_check_branch
      %35 = sbr.rel (0) target = $region13
    $region12: #{_matmul_pallas.1} parent=1 // pred_region
      %36 = dma.done [#allocation6], 40960
    $region13: #{_matmul_pallas.1} parent=1 // pred_fallthru
      _
    %s37 = sadd.s32 0, 0
    %s38 = smul.u32 %s37, 128
    %s39 = sadd.s32 %s38, 0
    %s40 = sld [smem:[#allocation3 + %s39]]
    %s41 = smul.u32 64, %s40
    %p42 = scmp.eq.s32.totalorder 0, 0
    // Predicated region
    $region14: #{_matmul_pallas.1} parent=1 // pred_check
      %p43 = pneg %p42
    $region15: #{_matmul_pallas.1} parent=1 // pred_check_branch
      %45 = sbr.rel (%p43) target = $region17
    $region16: #{_matmul_pallas.1} parent=1 // pred_region
      %46 = vst [vmem:[%s4] sm:$0xff] 0.0
      %47 = vst [vmem:[%s4 + $0x8] sm:$0xff] 0.0
      %48 = vst [vmem:[%s4 + $0x10] sm:$0xff] 0.0
      %49 = vst [vmem:[%s4 + $0x18] sm:$0xff] 0.0
      %50 = vst [vmem:[%s4 + $0x20] sm:$0xff] 0.0
      %51 = vst [vmem:[%s4 + $0x28] sm:$0xff] 0.0
      %52 = vst [vmem:[%s4 + $0x30] sm:$0xff] 0.0
      %53 = vst [vmem:[%s4 + $0x38] sm:$0xff] 0.0
      %54 = vst [vmem:[%s4 + $0x40] sm:$0xff] 0.0
      %55 = vst [vmem:[%s4 + $0x48] sm:$0xff] 0.0
      %56 = vst [vmem:[%s4 + $0x50] sm:$0xff] 0.0
      %57 = vst [vmem:[%s4 + $0x58] sm:$0xff] 0.0
      %58 = vst [vmem:[%s4 + $0x60] sm:$0xff] 0.0
      %59 = vst [vmem:[%s4 + $0x68] sm:$0xff] 0.0
      %60 = vst [vmem:[%s4 + $0x70] sm:$0xff] 0.0
      %61 = vst [vmem:[%s4 + $0x78] sm:$0xff] 0.0
      %62 = vst [vmem:[%s4 + $0x80] sm:$0xff] 0.0
      %63 = vst [vmem:[%s4 + $0x88] sm:$0xff] 0.0
      %64 = vst [vmem:[%s4 + $0x90] sm:$0xff] 0.0
      %65 = vst [vmem:[%s4 + $0x98] sm:$0xff] 0.0
    $region17: #{_matmul_pallas.1} parent=1 // pred_fallthru
      _
    %s66 = sld [smem:[#allocation4]]
    %p67 = scmp.lt.s32.totalorder 0, %s66
    // Predicated region
    $region18: #{_matmul_pallas.1} parent=1 // pred_check
      %p68 = pneg %p67
    $region19: #{_matmul_pallas.1} parent=1 // pred_check_branch
      %70 = sbr.rel (%p68) target = $region21
    $region20: #{_matmul_pallas.1} parent=1 // pred_region
      %s71 = sadd.s32 0, 0
      %s72 = smul.u32 %s71, 128
      %s73 = sadd.s32 %s72, 0
      %s74 = sld [smem:[#allocation3 + %s73]]
      %s75 = smul.u32 %s74, 512
      %v76 = vld [vmem:[%s4] sm:$0xff]
      %v77 = vld [vmem:[%s4 + $0x8] sm:$0xff]
      %v78 = vld [vmem:[%s4 + $0x10] sm:$0xff]
      %v79 = vld [vmem:[%s4 + $0x18] sm:$0xff]
      %v80 = vld [vmem:[%s4 + $0x20] sm:$0xff]
      %v81 = vld [vmem:[%s4 + $0x28] sm:$0xff]
      %v82 = vld [vmem:[%s4 + $0x30] sm:$0xff]
      %v83 = vld [vmem:[%s4 + $0x38] sm:$0xff]
      %v84 = vld [vmem:[%s4 + $0x40] sm:$0xff]
      %v85 = vld [vmem:[%s4 + $0x48] sm:$0xff]
      %v86 = vld [vmem:[%s4 + $0x50] sm:$0xff]
      %v87 = vld [vmem:[%s4 + $0x58] sm:$0xff]
      %v88 = vld [vmem:[%s4 + $0x60] sm:$0xff]
      %v89 = vld [vmem:[%s4 + $0x68] sm:$0xff]
      %v90 = vld [vmem:[%s4 + $0x70] sm:$0xff]
      %v91 = vld [vmem:[%s4 + $0x78] sm:$0xff]
      %v92 = vld [vmem:[%s4 + $0x80] sm:$0xff]
      %v93 = vld [vmem:[%s4 + $0x88] sm:$0xff]
      %v94 = vld [vmem:[%s4 + $0x90] sm:$0xff]
      %v95 = vld [vmem:[%s4 + $0x98] sm:$0xff]
      %s96 = sshra.s32 %s75, 7
      %s97 = sand.u32 %s75, 127
      %s98 = smul.addr %s96, 4
      %s99 = scalar_lea.vmem %s2, %s98
      %v100 = vld [vmem:[%s99] sm:$0xff]
      %v101 = vld [vmem:[%s99 + $0x8] sm:$0xff]
      %v102 = vld [vmem:[%s99 + $0x10] sm:$0xff]
      %v103 = vld [vmem:[%s99 + $0x18] sm:$0xff]
      %v104 = vld [vmem:[#allocation5] sm:$0xff]
      %v105 = vld [vmem:[#allocation5 + $0x8] sm:$0xff]
      %v106 = vld [vmem:[#allocation5 + $0x10] sm:$0xff]
      %v107 = vld [vmem:[#allocation5 + $0x18] sm:$0xff]
      %v108 = vld [vmem:[#allocation5 + $0x20] sm:$0xff]
      %v109 = vld [vmem:[#allocation5 + $0x28] sm:$0xff]
      %v110 = vld [vmem:[#allocation5 + $0x30] sm:$0xff]
      %v111 = vld [vmem:[#allocation5 + $0x38] sm:$0xff]
      %v112 = vld [vmem:[#allocation5 + $0x40] sm:$0xff]
      %v113 = vld [vmem:[#allocation5 + $0x48] sm:$0xff]
      %v114 = vld [vmem:[#allocation5 + $0x50] sm:$0xff]
      %v115 = vld [vmem:[#allocation5 + $0x58] sm:$0xff]
      %v116 = vld [vmem:[#allocation5 + $0x60] sm:$0xff]
      %v117 = vld [vmem:[#allocation5 + $0x68] sm:$0xff]
      %v118 = vld [vmem:[#allocation5 + $0x70] sm:$0xff]
      %v119 = vld [vmem:[#allocation5 + $0x78] sm:$0xff]
      %v120 = vld [vmem:[#allocation5 + $0x80] sm:$0xff]
      %v121 = vld [vmem:[#allocation5 + $0x88] sm:$0xff]
      %v122 = vld [vmem:[#allocation5 + $0x90] sm:$0xff]
      %v123 = vld [vmem:[#allocation5 + $0x98] sm:$0xff]
      %v124 = vld [vmem:[#allocation5 + $0xa0] sm:$0xff]
      %v125 = vld [vmem:[#allocation5 + $0xa8] sm:$0xff]
      %v126 = vld [vmem:[#allocation5 + $0xb0] sm:$0xff]
      %v127 = vld [vmem:[#allocation5 + $0xb8] sm:$0xff]
      %v128 = vld [vmem:[#allocation5 + $0xc0] sm:$0xff]
      %v129 = vld [vmem:[#allocation5 + $0xc8] sm:$0xff]
      %v130 = vld [vmem:[#allocation5 + $0xd0] sm:$0xff]
      %v131 = vld [vmem:[#allocation5 + $0xd8] sm:$0xff]
      %v132 = vld [vmem:[#allocation5 + $0xe0] sm:$0xff]
      %v133 = vld [vmem:[#allocation5 + $0xe8] sm:$0xff]
      %v134 = vld [vmem:[#allocation5 + $0xf0] sm:$0xff]
      %v135 = vld [vmem:[#allocation5 + $0xf8] sm:$0xff]
      %v136 = vld [vmem:[#allocation5 + $0x100] sm:$0xff]
      %v137 = vld [vmem:[#allocation5 + $0x108] sm:$0xff]
      %v138 = vld [vmem:[#allocation5 + $0x110] sm:$0xff]
      %v139 = vld [vmem:[#allocation5 + $0x118] sm:$0xff]
      %v140 = vld [vmem:[#allocation5 + $0x120] sm:$0xff]
      %v141 = vld [vmem:[#allocation5 + $0x128] sm:$0xff]
      %v142 = vld [vmem:[#allocation5 + $0x130] sm:$0xff]
      %v143 = vld [vmem:[#allocation5 + $0x138] sm:$0xff]
      %v144 = vld [vmem:[#allocation5 + $0x140] sm:$0xff]
      %v145 = vld [vmem:[#allocation5 + $0x148] sm:$0xff]
      %v146 = vld [vmem:[#allocation5 + $0x150] sm:$0xff]
      %v147 = vld [vmem:[#allocation5 + $0x158] sm:$0xff]
      %v148 = vld [vmem:[#allocation5 + $0x160] sm:$0xff]
      %v149 = vld [vmem:[#allocation5 + $0x168] sm:$0xff]
      %v150 = vld [vmem:[#allocation5 + $0x170] sm:$0xff]
      %v151 = vld [vmem:[#allocation5 + $0x178] sm:$0xff]
      %v152 = vld [vmem:[#allocation5 + $0x180] sm:$0xff]
      %v153 = vld [vmem:[#allocation5 + $0x188] sm:$0xff]
      %v154 = vld [vmem:[#allocation5 + $0x190] sm:$0xff]
      %v155 = vld [vmem:[#allocation5 + $0x198] sm:$0xff]
      %v156 = vld [vmem:[#allocation5 + $0x1a0] sm:$0xff]
      %v157 = vld [vmem:[#allocation5 + $0x1a8] sm:$0xff]
      %v158 = vld [vmem:[#allocation5 + $0x1b0] sm:$0xff]
      %v159 = vld [vmem:[#allocation5 + $0x1b8] sm:$0xff]
      %v160 = vld [vmem:[#allocation5 + $0x1c0] sm:$0xff]
      %v161 = vld [vmem:[#allocation5 + $0x1c8] sm:$0xff]
      %v162 = vld [vmem:[#allocation5 + $0x1d0] sm:$0xff]
      %v163 = vld [vmem:[#allocation5 + $0x1d8] sm:$0xff]
      %v164 = vld [vmem:[#allocation5 + $0x1e0] sm:$0xff]
      %v165 = vld [vmem:[#allocation5 + $0x1e8] sm:$0xff]
      %v166 = vld [vmem:[#allocation5 + $0x1f0] sm:$0xff]
      %v167 = vld [vmem:[#allocation5 + $0x1f8] sm:$0xff]
      %v168 = vld [vmem:[#allocation5 + $0x200] sm:$0xff]
      %v169 = vld [vmem:[#allocation5 + $0x208] sm:$0xff]
      %v170 = vld [vmem:[#allocation5 + $0x210] sm:$0xff]
      %v171 = vld [vmem:[#allocation5 + $0x218] sm:$0xff]
      %v172 = vld [vmem:[#allocation5 + $0x220] sm:$0xff]
      %v173 = vld [vmem:[#allocation5 + $0x228] sm:$0xff]
      %v174 = vld [vmem:[#allocation5 + $0x230] sm:$0xff]
      %v175 = vld [vmem:[#allocation5 + $0x238] sm:$0xff]
      %v176 = vld [vmem:[#allocation5 + $0x240] sm:$0xff]
      %v177 = vld [vmem:[#allocation5 + $0x248] sm:$0xff]
      %v178 = vld [vmem:[#allocation5 + $0x250] sm:$0xff]
      %v179 = vld [vmem:[#allocation5 + $0x258] sm:$0xff]
      %v180 = vld [vmem:[#allocation5 + $0x260] sm:$0xff]
      %v181 = vld [vmem:[#allocation5 + $0x268] sm:$0xff]
      %v182 = vld [vmem:[#allocation5 + $0x270] sm:$0xff]
      %v183 = vld [vmem:[#allocation5 + $0x278] sm:$0xff]
      %v184 = vld [vmem:[#allocation5 + $0x280] sm:$0xff]
      %v185 = vld [vmem:[#allocation5 + $0x288] sm:$0xff]
      %v186 = vld [vmem:[#allocation5 + $0x290] sm:$0xff]
      %v187 = vld [vmem:[#allocation5 + $0x298] sm:$0xff]
      %v188 = vld [vmem:[#allocation5 + $0x2a0] sm:$0xff]
      %v189 = vld [vmem:[#allocation5 + $0x2a8] sm:$0xff]
      %v190 = vld [vmem:[#allocation5 + $0x2b0] sm:$0xff]
      %v191 = vld [vmem:[#allocation5 + $0x2b8] sm:$0xff]
      %v192 = vld [vmem:[#allocation5 + $0x2c0] sm:$0xff]
      %v193 = vld [vmem:[#allocation5 + $0x2c8] sm:$0xff]
      %v194 = vld [vmem:[#allocation5 + $0x2d0] sm:$0xff]
      %v195 = vld [vmem:[#allocation5 + $0x2d8] sm:$0xff]
      %v196 = vld [vmem:[#allocation5 + $0x2e0] sm:$0xff]
      %v197 = vld [vmem:[#allocation5 + $0x2e8] sm:$0xff]
      %v198 = vld [vmem:[#allocation5 + $0x2f0] sm:$0xff]
      %v199 = vld [vmem:[#allocation5 + $0x2f8] sm:$0xff]
      %v200 = vld [vmem:[#allocation5 + $0x300] sm:$0xff]
      %v201 = vld [vmem:[#allocation5 + $0x308] sm:$0xff]
      %v202 = vld [vmem:[#allocation5 + $0x310] sm:$0xff]
      %v203 = vld [vmem:[#allocation5 + $0x318] sm:$0xff]
      %v204 = vld [vmem:[#allocation5 + $0x320] sm:$0xff]
      %v205 = vld [vmem:[#allocation5 + $0x328] sm:$0xff]
      %v206 = vld [vmem:[#allocation5 + $0x330] sm:$0xff]
      %v207 = vld [vmem:[#allocation5 + $0x338] sm:$0xff]
      %v208 = vld [vmem:[#allocation5 + $0x340] sm:$0xff]
      %v209 = vld [vmem:[#allocation5 + $0x348] sm:$0xff]
      %v210 = vld [vmem:[#allocation5 + $0x350] sm:$0xff]
      %v211 = vld [vmem:[#allocation5 + $0x358] sm:$0xff]
      %v212 = vld [vmem:[#allocation5 + $0x360] sm:$0xff]
      %v213 = vld [vmem:[#allocation5 + $0x368] sm:$0xff]
      %v214 = vld [vmem:[#allocation5 + $0x370] sm:$0xff]
      %v215 = vld [vmem:[#allocation5 + $0x378] sm:$0xff]
      %v216 = vld [vmem:[#allocation5 + $0x380] sm:$0xff]
      %v217 = vld [vmem:[#allocation5 + $0x388] sm:$0xff]
      %v218 = vld [vmem:[#allocation5 + $0x390] sm:$0xff]
      %v219 = vld [vmem:[#allocation5 + $0x398] sm:$0xff]
      %v220 = vld [vmem:[#allocation5 + $0x3a0] sm:$0xff]
      %v221 = vld [vmem:[#allocation5 + $0x3a8] sm:$0xff]
      %v222 = vld [vmem:[#allocation5 + $0x3b0] sm:$0xff]
      %v223 = vld [vmem:[#allocation5 + $0x3b8] sm:$0xff]
      %v224 = vld [vmem:[#allocation5 + $0x3c0] sm:$0xff]
      %v225 = vld [vmem:[#allocation5 + $0x3c8] sm:$0xff]
      %v226 = vld [vmem:[#allocation5 + $0x3d0] sm:$0xff]
      %v227 = vld [vmem:[#allocation5 + $0x3d8] sm:$0xff]
      %v228 = vld [vmem:[#allocation5 + $0x3e0] sm:$0xff]
      %v229 = vld [vmem:[#allocation5 + $0x3e8] sm:$0xff]
      %v230 = vld [vmem:[#allocation5 + $0x3f0] sm:$0xff]
      %v231 = vld [vmem:[#allocation5 + $0x3f8] sm:$0xff]
      %v232 = vld [vmem:[#allocation5 + $0x400] sm:$0xff]
      %v233 = vld [vmem:[#allocation5 + $0x408] sm:$0xff]
      %v234 = vld [vmem:[#allocation5 + $0x410] sm:$0xff]
      %v235 = vld [vmem:[#allocation5 + $0x418] sm:$0xff]
      %v236 = vld [vmem:[#allocation5 + $0x420] sm:$0xff]
      %v237 = vld [vmem:[#allocation5 + $0x428] sm:$0xff]
      %v238 = vld [vmem:[#allocation5 + $0x430] sm:$0xff]
      %v239 = vld [vmem:[#allocation5 + $0x438] sm:$0xff]
      %v240 = vld [vmem:[#allocation5 + $0x440] sm:$0xff]
      %v241 = vld [vmem:[#allocation5 + $0x448] sm:$0xff]
      %v242 = vld [vmem:[#allocation5 + $0x450] sm:$0xff]
      %v243 = vld [vmem:[#allocation5 + $0x458] sm:$0xff]
      %v244 = vld [vmem:[#allocation5 + $0x460] sm:$0xff]
      %v245 = vld [vmem:[#allocation5 + $0x468] sm:$0xff]
      %v246 = vld [vmem:[#allocation5 + $0x470] sm:$0xff]
      %v247 = vld [vmem:[#allocation5 + $0x478] sm:$0xff]
      %v248 = vld [vmem:[#allocation5 + $0x480] sm:$0xff]
      %v249 = vld [vmem:[#allocation5 + $0x488] sm:$0xff]
      %v250 = vld [vmem:[#allocation5 + $0x490] sm:$0xff]
      %v251 = vld [vmem:[#allocation5 + $0x498] sm:$0xff]
      %v252 = vld [vmem:[#allocation5 + $0x4a0] sm:$0xff]
      %v253 = vld [vmem:[#allocation5 + $0x4a8] sm:$0xff]
      %v254 = vld [vmem:[#allocation5 + $0x4b0] sm:$0xff]
      %v255 = vld [vmem:[#allocation5 + $0x4b8] sm:$0xff]
      %v256 = vld [vmem:[#allocation5 + $0x4c0] sm:$0xff]
      %v257 = vld [vmem:[#allocation5 + $0x4c8] sm:$0xff]
      %v258 = vld [vmem:[#allocation5 + $0x4d0] sm:$0xff]
      %v259 = vld [vmem:[#allocation5 + $0x4d8] sm:$0xff]
      %v260 = vld [vmem:[#allocation5 + $0x4e0] sm:$0xff]
      %v261 = vld [vmem:[#allocation5 + $0x4e8] sm:$0xff]
      %v262 = vld [vmem:[#allocation5 + $0x4f0] sm:$0xff]
      %v263 = vld [vmem:[#allocation5 + $0x4f8] sm:$0xff]
      %v264 = vld [vmem:[#allocation5 + $0x500] sm:$0xff]
      %v265 = vld [vmem:[#allocation5 + $0x508] sm:$0xff]
      %v266 = vld [vmem:[#allocation5 + $0x510] sm:$0xff]
      %v267 = vld [vmem:[#allocation5 + $0x518] sm:$0xff]
      %v268 = vld [vmem:[#allocation5 + $0x520] sm:$0xff]
      %v269 = vld [vmem:[#allocation5 + $0x528] sm:$0xff]
      %v270 = vld [vmem:[#allocation5 + $0x530] sm:$0xff]
      %v271 = vld [vmem:[#allocation5 + $0x538] sm:$0xff]
      %v272 = vld [vmem:[#allocation5 + $0x540] sm:$0xff]
      %v273 = vld [vmem:[#allocation5 + $0x548] sm:$0xff]
      %v274 = vld [vmem:[#allocation5 + $0x550] sm:$0xff]
      %v275 = vld [vmem:[#allocation5 + $0x558] sm:$0xff]
      %v276 = vld [vmem:[#allocation5 + $0x560] sm:$0xff]
      %v277 = vld [vmem:[#allocation5 + $0x568] sm:$0xff]
      %v278 = vld [vmem:[#allocation5 + $0x570] sm:$0xff]
      %v279 = vld [vmem:[#allocation5 + $0x578] sm:$0xff]
      %v280 = vld [vmem:[#allocation5 + $0x580] sm:$0xff]
      %v281 = vld [vmem:[#allocation5 + $0x588] sm:$0xff]
      %v282 = vld [vmem:[#allocation5 + $0x590] sm:$0xff]
      %v283 = vld [vmem:[#allocation5 + $0x598] sm:$0xff]
      %v284 = vld [vmem:[#allocation5 + $0x5a0] sm:$0xff]
      %v285 = vld [vmem:[#allocation5 + $0x5a8] sm:$0xff]
      %v286 = vld [vmem:[#allocation5 + $0x5b0] sm:$0xff]
      %v287 = vld [vmem:[#allocation5 + $0x5b8] sm:$0xff]
      %v288 = vld [vmem:[#allocation5 + $0x5c0] sm:$0xff]
      %v289 = vld [vmem:[#allocation5 + $0x5c8] sm:$0xff]
      %v290 = vld [vmem:[#allocation5 + $0x5d0] sm:$0xff]
      %v291 = vld [vmem:[#allocation5 + $0x5d8] sm:$0xff]
      %v292 = vld [vmem:[#allocation5 + $0x5e0] sm:$0xff]
      %v293 = vld [vmem:[#allocation5 + $0x5e8] sm:$0xff]
      %v294 = vld [vmem:[#allocation5 + $0x5f0] sm:$0xff]
      %v295 = vld [vmem:[#allocation5 + $0x5f8] sm:$0xff]
      %v296 = vld [vmem:[#allocation5 + $0x600] sm:$0xff]
      %v297 = vld [vmem:[#allocation5 + $0x608] sm:$0xff]
      %v298 = vld [vmem:[#allocation5 + $0x610] sm:$0xff]
      %v299 = vld [vmem:[#allocation5 + $0x618] sm:$0xff]
      %v300 = vld [vmem:[#allocation5 + $0x620] sm:$0xff]
      %v301 = vld [vmem:[#allocation5 + $0x628] sm:$0xff]
      %v302 = vld [vmem:[#allocation5 + $0x630] sm:$0xff]
      %v303 = vld [vmem:[#allocation5 + $0x638] sm:$0xff]
      %v304 = vld [vmem:[#allocation5 + $0x640] sm:$0xff]
      %v305 = vld [vmem:[#allocation5 + $0x648] sm:$0xff]
      %v306 = vld [vmem:[#allocation5 + $0x650] sm:$0xff]
      %v307 = vld [vmem:[#allocation5 + $0x658] sm:$0xff]
      %v308 = vld [vmem:[#allocation5 + $0x660] sm:$0xff]
      %v309 = vld [vmem:[#allocation5 + $0x668] sm:$0xff]
      %v310 = vld [vmem:[#allocation5 + $0x670] sm:$0xff]
      %v311 = vld [vmem:[#allocation5 + $0x678] sm:$0xff]
      %v312 = vld [vmem:[#allocation5 + $0x680] sm:$0xff]
      %v313 = vld [vmem:[#allocation5 + $0x688] sm:$0xff]
      %v314 = vld [vmem:[#allocation5 + $0x690] sm:$0xff]
      %v315 = vld [vmem:[#allocation5 + $0x698] sm:$0xff]
      %v316 = vld [vmem:[#allocation5 + $0x6a0] sm:$0xff]
      %v317 = vld [vmem:[#allocation5 + $0x6a8] sm:$0xff]
      %v318 = vld [vmem:[#allocation5 + $0x6b0] sm:$0xff]
      %v319 = vld [vmem:[#allocation5 + $0x6b8] sm:$0xff]
      %v320 = vld [vmem:[#allocation5 + $0x6c0] sm:$0xff]
      %v321 = vld [vmem:[#allocation5 + $0x6c8] sm:$0xff]
      %v322 = vld [vmem:[#allocation5 + $0x6d0] sm:$0xff]
      %v323 = vld [vmem:[#allocation5 + $0x6d8] sm:$0xff]
      %v324 = vld [vmem:[#allocation5 + $0x6e0] sm:$0xff]
      %v325 = vld [vmem:[#allocation5 + $0x6e8] sm:$0xff]
      %v326 = vld [vmem:[#allocation5 + $0x6f0] sm:$0xff]
      %v327 = vld [vmem:[#allocation5 + $0x6f8] sm:$0xff]
      %v328 = vld [vmem:[#allocation5 + $0x700] sm:$0xff]
      %v329 = vld [vmem:[#allocation5 + $0x708] sm:$0xff]
      %v330 = vld [vmem:[#allocation5 + $0x710] sm:$0xff]
      %v331 = vld [vmem:[#allocation5 + $0x718] sm:$0xff]
      %v332 = vld [vmem:[#allocation5 + $0x720] sm:$0xff]
      %v333 = vld [vmem:[#allocation5 + $0x728] sm:$0xff]
      %v334 = vld [vmem:[#allocation5 + $0x730] sm:$0xff]
      %v335 = vld [vmem:[#allocation5 + $0x738] sm:$0xff]
      %v336 = vld [vmem:[#allocation5 + $0x740] sm:$0xff]
      %v337 = vld [vmem:[#allocation5 + $0x748] sm:$0xff]
      %v338 = vld [vmem:[#allocation5 + $0x750] sm:$0xff]
      %v339 = vld [vmem:[#allocation5 + $0x758] sm:$0xff]
      %v340 = vld [vmem:[#allocation5 + $0x760] sm:$0xff]
      %v341 = vld [vmem:[#allocation5 + $0x768] sm:$0xff]
      %v342 = vld [vmem:[#allocation5 + $0x770] sm:$0xff]
      %v343 = vld [vmem:[#allocation5 + $0x778] sm:$0xff]
      %v344 = vld [vmem:[#allocation5 + $0x780] sm:$0xff]
      %v345 = vld [vmem:[#allocation5 + $0x788] sm:$0xff]
      %v346 = vld [vmem:[#allocation5 + $0x790] sm:$0xff]
      %v347 = vld [vmem:[#allocation5 + $0x798] sm:$0xff]
      %v348 = vld [vmem:[#allocation5 + $0x7a0] sm:$0xff]
      %v349 = vld [vmem:[#allocation5 + $0x7a8] sm:$0xff]
      %v350 = vld [vmem:[#allocation5 + $0x7b0] sm:$0xff]
      %v351 = vld [vmem:[#allocation5 + $0x7b8] sm:$0xff]
      %v352 = vld [vmem:[#allocation5 + $0x7c0] sm:$0xff]
      %v353 = vld [vmem:[#allocation5 + $0x7c8] sm:$0xff]
      %v354 = vld [vmem:[#allocation5 + $0x7d0] sm:$0xff]
      %v355 = vld [vmem:[#allocation5 + $0x7d8] sm:$0xff]
      %v356 = vld [vmem:[#allocation5 + $0x7e0] sm:$0xff]
      %v357 = vld [vmem:[#allocation5 + $0x7e8] sm:$0xff]
      %v358 = vld [vmem:[#allocation5 + $0x7f0] sm:$0xff]
      %v359 = vld [vmem:[#allocation5 + $0x7f8] sm:$0xff]
      %v360 = vld [vmem:[#allocation5 + $0x800] sm:$0xff]
      %v361 = vld [vmem:[#allocation5 + $0x808] sm:$0xff]
      %v362 = vld [vmem:[#allocation5 + $0x810] sm:$0xff]
      %v363 = vld [vmem:[#allocation5 + $0x818] sm:$0xff]
      %v364 = vld [vmem:[#allocation5 + $0x820] sm:$0xff]
      %v365 = vld [vmem:[#allocation5 + $0x828] sm:$0xff]
      %v366 = vld [vmem:[#allocation5 + $0x830] sm:$0xff]
      %v367 = vld [vmem:[#allocation5 + $0x838] sm:$0xff]
      %v368 = vld [vmem:[#allocation5 + $0x840] sm:$0xff]
      %v369 = vld [vmem:[#allocation5 + $0x848] sm:$0xff]
      %v370 = vld [vmem:[#allocation5 + $0x850] sm:$0xff]
      %v371 = vld [vmem:[#allocation5 + $0x858] sm:$0xff]
      %v372 = vld [vmem:[#allocation5 + $0x860] sm:$0xff]
      %v373 = vld [vmem:[#allocation5 + $0x868] sm:$0xff]
      %v374 = vld [vmem:[#allocation5 + $0x870] sm:$0xff]
      %v375 = vld [vmem:[#allocation5 + $0x878] sm:$0xff]
      %v376 = vld [vmem:[#allocation5 + $0x880] sm:$0xff]
      %v377 = vld [vmem:[#allocation5 + $0x888] sm:$0xff]
      %v378 = vld [vmem:[#allocation5 + $0x890] sm:$0xff]
      %v379 = vld [vmem:[#allocation5 + $0x898] sm:$0xff]
      %v380 = vld [vmem:[#allocation5 + $0x8a0] sm:$0xff]
      %v381 = vld [vmem:[#allocation5 + $0x8a8] sm:$0xff]
      %v382 = vld [vmem:[#allocation5 + $0x8b0] sm:$0xff]
      %v383 = vld [vmem:[#allocation5 + $0x8b8] sm:$0xff]
      %v384 = vld [vmem:[#allocation5 + $0x8c0] sm:$0xff]
      %v385 = vld [vmem:[#allocation5 + $0x8c8] sm:$0xff]
      %v386 = vld [vmem:[#allocation5 + $0x8d0] sm:$0xff]
      %v387 = vld [vmem:[#allocation5 + $0x8d8] sm:$0xff]
      %v388 = vld [vmem:[#allocation5 + $0x8e0] sm:$0xff]
      %v389 = vld [vmem:[#allocation5 + $0x8e8] sm:$0xff]
      %v390 = vld [vmem:[#allocation5 + $0x8f0] sm:$0xff]
      %v391 = vld [vmem:[#allocation5 + $0x8f8] sm:$0xff]
      %v392 = vld [vmem:[#allocation5 + $0x900] sm:$0xff]
      %v393 = vld [vmem:[#allocation5 + $0x908] sm:$0xff]
      %v394 = vld [vmem:[#allocation5 + $0x910] sm:$0xff]
      %v395 = vld [vmem:[#allocation5 + $0x918] sm:$0xff]
      %v396 = vld [vmem:[#allocation5 + $0x920] sm:$0xff]
      %v397 = vld [vmem:[#allocation5 + $0x928] sm:$0xff]
      %v398 = vld [vmem:[#allocation5 + $0x930] sm:$0xff]
      %v399 = vld [vmem:[#allocation5 + $0x938] sm:$0xff]
      %v400 = vld [vmem:[#allocation5 + $0x940] sm:$0xff]
      %v401 = vld [vmem:[#allocation5 + $0x948] sm:$0xff]
      %v402 = vld [vmem:[#allocation5 + $0x950] sm:$0xff]
      %v403 = vld [vmem:[#allocation5 + $0x958] sm:$0xff]
      %v404 = vld [vmem:[#allocation5 + $0x960] sm:$0xff]
      %v405 = vld [vmem:[#allocation5 + $0x968] sm:$0xff]
      %v406 = vld [vmem:[#allocation5 + $0x970] sm:$0xff]
      %v407 = vld [vmem:[#allocation5 + $0x978] sm:$0xff]
      %v408 = vld [vmem:[#allocation5 + $0x980] sm:$0xff]
      %v409 = vld [vmem:[#allocation5 + $0x988] sm:$0xff]
      %v410 = vld [vmem:[#allocation5 + $0x990] sm:$0xff]
      %v411 = vld [vmem:[#allocation5 + $0x998] sm:$0xff]
      %v412 = vld [vmem:[#allocation5 + $0x9a0] sm:$0xff]
      %v413 = vld [vmem:[#allocation5 + $0x9a8] sm:$0xff]
      %v414 = vld [vmem:[#allocation5 + $0x9b0] sm:$0xff]
      %v415 = vld [vmem:[#allocation5 + $0x9b8] sm:$0xff]
      %v416 = vld [vmem:[#allocation5 + $0x9c0] sm:$0xff]
      %v417 = vld [vmem:[#allocation5 + $0x9c8] sm:$0xff]
      %v418 = vld [vmem:[#allocation5 + $0x9d0] sm:$0xff]
      %v419 = vld [vmem:[#allocation5 + $0x9d8] sm:$0xff]
      %v420 = vld [vmem:[#allocation5 + $0x9e0] sm:$0xff]
      %v421 = vld [vmem:[#allocation5 + $0x9e8] sm:$0xff]
      %v422 = vld [vmem:[#allocation5 + $0x9f0] sm:$0xff]
      %v423 = vld [vmem:[#allocation5 + $0x9f8] sm:$0xff]
      %v428 = vunpack.c.l.b16 %v100
      %v429 = vunpack.c.h.b16 %v100
      %v430 = vunpack.c.l.b16 %v101
      %v431 = vunpack.c.h.b16 %v101
      %v432 = vunpack.c.l.b16 %v102
      %v433 = vunpack.c.h.b16 %v102
      %v434 = vunpack.c.l.b16 %v103
      %v435 = vunpack.c.h.b16 %v103
      %v436 = vpack.c.b16 %v432, %v428
      %v437 = vpack.c.b16 %v433, %v429
      %v438 = vpack.c.b16 %v434, %v430
      %v439 = vpack.c.b16 %v435, %v431
      %v764 = vunpack.c.l.b16 %v104
      %v765 = vunpack.c.h.b16 %v104
      %v766 = vunpack.c.l.b16 %v105
      %v767 = vunpack.c.h.b16 %v105
      %v768 = vunpack.c.l.b16 %v106
      %v769 = vunpack.c.h.b16 %v106
      %v770 = vunpack.c.l.b16 %v107
      %v771 = vunpack.c.h.b16 %v107
      %v772 = vunpack.c.l.b16 %v108
      %v773 = vunpack.c.h.b16 %v108
      %v774 = vunpack.c.l.b16 %v109
      %v775 = vunpack.c.h.b16 %v109
      %v776 = vunpack.c.l.b16 %v110
      %v777 = vunpack.c.h.b16 %v110
      %v778 = vunpack.c.l.b16 %v111
      %v779 = vunpack.c.h.b16 %v111
      %v780 = vunpack.c.l.b16 %v112
      %v781 = vunpack.c.h.b16 %v112
      %v782 = vunpack.c.l.b16 %v113
      %v783 = vunpack.c.h.b16 %v113
      %v784 = vunpack.c.l.b16 %v114
      %v785 = vunpack.c.h.b16 %v114
      %v786 = vunpack.c.l.b16 %v115
      %v787 = vunpack.c.h.b16 %v115
      %v788 = vunpack.c.l.b16 %v116
      %v789 = vunpack.c.h.b16 %v116
      %v790 = vunpack.c.l.b16 %v117
      %v791 = vunpack.c.h.b16 %v117
      %v792 = vunpack.c.l.b16 %v118
      %v793 = vunpack.c.h.b16 %v118
      %v794 = vunpack.c.l.b16 %v119
      %v795 = vunpack.c.h.b16 %v119
      %v796 = vunpack.c.l.b16 %v120
      %v797 = vunpack.c.h.b16 %v120
      %v798 = vunpack.c.l.b16 %v121
      %v799 = vunpack.c.h.b16 %v121
      %v800 = vunpack.c.l.b16 %v122
      %v801 = vunpack.c.h.b16 %v122
      %v802 = vunpack.c.l.b16 %v123
      %v803 = vunpack.c.h.b16 %v123
      %v804 = vunpack.c.l.b16 %v124
      %v805 = vunpack.c.h.b16 %v124
      %v806 = vunpack.c.l.b16 %v125
      %v807 = vunpack.c.h.b16 %v125
      %v808 = vunpack.c.l.b16 %v126
      %v809 = vunpack.c.h.b16 %v126
      %v810 = vunpack.c.l.b16 %v127
      %v811 = vunpack.c.h.b16 %v127
      %v812 = vunpack.c.l.b16 %v128
      %v813 = vunpack.c.h.b16 %v128
      %v814 = vunpack.c.l.b16 %v129
      %v815 = vunpack.c.h.b16 %v129
      %v816 = vunpack.c.l.b16 %v130
      %v817 = vunpack.c.h.b16 %v130
      %v818 = vunpack.c.l.b16 %v131
      %v819 = vunpack.c.h.b16 %v131
      %v820 = vunpack.c.l.b16 %v132
      %v821 = vunpack.c.h.b16 %v132
      %v822 = vunpack.c.l.b16 %v133
      %v823 = vunpack.c.h.b16 %v133
      %v824 = vunpack.c.l.b16 %v134
      %v825 = vunpack.c.h.b16 %v134
      %v826 = vunpack.c.l.b16 %v135
      %v827 = vunpack.c.h.b16 %v135
      %v828 = vunpack.c.l.b16 %v136
      %v829 = vunpack.c.h.b16 %v136
      %v830 = vunpack.c.l.b16 %v137
      %v831 = vunpack.c.h.b16 %v137
      %v832 = vunpack.c.l.b16 %v138
      %v833 = vunpack.c.h.b16 %v138
      %v834 = vunpack.c.l.b16 %v139
      %v835 = vunpack.c.h.b16 %v139
      %v836 = vunpack.c.l.b16 %v140
      %v837 = vunpack.c.h.b16 %v140
      %v838 = vunpack.c.l.b16 %v141
      %v839 = vunpack.c.h.b16 %v141
      %v840 = vunpack.c.l.b16 %v142
      %v841 = vunpack.c.h.b16 %v142
      %v842 = vunpack.c.l.b16 %v143
      %v843 = vunpack.c.h.b16 %v143
      %v844 = vunpack.c.l.b16 %v144
      %v845 = vunpack.c.h.b16 %v144
      %v846 = vunpack.c.l.b16 %v145
      %v847 = vunpack.c.h.b16 %v145
      %v848 = vunpack.c.l.b16 %v146
      %v849 = vunpack.c.h.b16 %v146
      %v850 = vunpack.c.l.b16 %v147
      %v851 = vunpack.c.h.b16 %v147
      %v852 = vunpack.c.l.b16 %v148
      %v853 = vunpack.c.h.b16 %v148
      %v854 = vunpack.c.l.b16 %v149
      %v855 = vunpack.c.h.b16 %v149
      %v856 = vunpack.c.l.b16 %v150
      %v857 = vunpack.c.h.b16 %v150
      %v858 = vunpack.c.l.b16 %v151
      %v859 = vunpack.c.h.b16 %v151
      %v860 = vunpack.c.l.b16 %v152
      %v861 = vunpack.c.h.b16 %v152
      %v862 = vunpack.c.l.b16 %v153
      %v863 = vunpack.c.h.b16 %v153
      %v864 = vunpack.c.l.b16 %v154
      %v865 = vunpack.c.h.b16 %v154
      %v866 = vunpack.c.l.b16 %v155
      %v867 = vunpack.c.h.b16 %v155
      %v868 = vunpack.c.l.b16 %v156
      %v869 = vunpack.c.h.b16 %v156
      %v870 = vunpack.c.l.b16 %v157
      %v871 = vunpack.c.h.b16 %v157
      %v872 = vunpack.c.l.b16 %v158
      %v873 = vunpack.c.h.b16 %v158
      %v874 = vunpack.c.l.b16 %v159
      %v875 = vunpack.c.h.b16 %v159
      %v876 = vunpack.c.l.b16 %v160
      %v877 = vunpack.c.h.b16 %v160
      %v878 = vunpack.c.l.b16 %v161
      %v879 = vunpack.c.h.b16 %v161
      %v880 = vunpack.c.l.b16 %v162
      %v881 = vunpack.c.h.b16 %v162
      %v882 = vunpack.c.l.b16 %v163
      %v883 = vunpack.c.h.b16 %v163
      %v884 = vunpack.c.l.b16 %v164
      %v885 = vunpack.c.h.b16 %v164
      %v886 = vunpack.c.l.b16 %v165
      %v887 = vunpack.c.h.b16 %v165
      %v888 = vunpack.c.l.b16 %v166
      %v889 = vunpack.c.h.b16 %v166
      %v890 = vunpack.c.l.b16 %v167
      %v891 = vunpack.c.h.b16 %v167
      %v892 = vunpack.c.l.b16 %v168
      %v893 = vunpack.c.h.b16 %v168
      %v894 = vunpack.c.l.b16 %v169
      %v895 = vunpack.c.h.b16 %v169
      %v896 = vunpack.c.l.b16 %v170
      %v897 = vunpack.c.h.b16 %v170
      %v898 = vunpack.c.l.b16 %v171
      %v899 = vunpack.c.h.b16 %v171
      %v900 = vunpack.c.l.b16 %v172
      %v901 = vunpack.c.h.b16 %v172
      %v902 = vunpack.c.l.b16 %v173
      %v903 = vunpack.c.h.b16 %v173
      %v904 = vunpack.c.l.b16 %v174
      %v905 = vunpack.c.h.b16 %v174
      %v906 = vunpack.c.l.b16 %v175
      %v907 = vunpack.c.h.b16 %v175
      %v908 = vunpack.c.l.b16 %v176
      %v909 = vunpack.c.h.b16 %v176
      %v910 = vunpack.c.l.b16 %v177
      %v911 = vunpack.c.h.b16 %v177
      %v912 = vunpack.c.l.b16 %v178
      %v913 = vunpack.c.h.b16 %v178
      %v914 = vunpack.c.l.b16 %v179
      %v915 = vunpack.c.h.b16 %v179
      %v916 = vunpack.c.l.b16 %v180
      %v917 = vunpack.c.h.b16 %v180
      %v918 = vunpack.c.l.b16 %v181
      %v919 = vunpack.c.h.b16 %v181
      %v920 = vunpack.c.l.b16 %v182
      %v921 = vunpack.c.h.b16 %v182
      %v922 = vunpack.c.l.b16 %v183
      %v923 = vunpack.c.h.b16 %v183
      %v924 = vunpack.c.l.b16 %v184
      %v925 = vunpack.c.h.b16 %v184
      %v926 = vunpack.c.l.b16 %v185
      %v927 = vunpack.c.h.b16 %v185
      %v928 = vunpack.c.l.b16 %v186
      %v929 = vunpack.c.h.b16 %v186
      %v930 = vunpack.c.l.b16 %v187
      %v931 = vunpack.c.h.b16 %v187
      %v932 = vunpack.c.l.b16 %v188
      %v933 = vunpack.c.h.b16 %v188
      %v934 = vunpack.c.l.b16 %v189
      %v935 = vunpack.c.h.b16 %v189
      %v936 = vunpack.c.l.b16 %v190
      %v937 = vunpack.c.h.b16 %v190
      %v938 = vunpack.c.l.b16 %v191
      %v939 = vunpack.c.h.b16 %v191
      %v940 = vunpack.c.l.b16 %v192
      %v941 = vunpack.c.h.b16 %v192
      %v942 = vunpack.c.l.b16 %v193
      %v943 = vunpack.c.h.b16 %v193
      %v944 = vunpack.c.l.b16 %v194
      %v945 = vunpack.c.h.b16 %v194
      %v946 = vunpack.c.l.b16 %v195
      %v947 = vunpack.c.h.b16 %v195
      %v948 = vunpack.c.l.b16 %v196
      %v949 = vunpack.c.h.b16 %v196
      %v950 = vunpack.c.l.b16 %v197
      %v951 = vunpack.c.h.b16 %v197
      %v952 = vunpack.c.l.b16 %v198
      %v953 = vunpack.c.h.b16 %v198
      %v954 = vunpack.c.l.b16 %v199
      %v955 = vunpack.c.h.b16 %v199
      %v956 = vunpack.c.l.b16 %v200
      %v957 = vunpack.c.h.b16 %v200
      %v958 = vunpack.c.l.b16 %v201
      %v959 = vunpack.c.h.b16 %v201
      %v960 = vunpack.c.l.b16 %v202
      %v961 = vunpack.c.h.b16 %v202
      %v962 = vunpack.c.l.b16 %v203
      %v963 = vunpack.c.h.b16 %v203
      %v964 = vunpack.c.l.b16 %v204
      %v965 = vunpack.c.h.b16 %v204
      %v966 = vunpack.c.l.b16 %v205
      %v967 = vunpack.c.h.b16 %v205
      %v968 = vunpack.c.l.b16 %v206
      %v969 = vunpack.c.h.b16 %v206
      %v970 = vunpack.c.l.b16 %v207
      %v971 = vunpack.c.h.b16 %v207
      %v972 = vunpack.c.l.b16 %v208
      %v973 = vunpack.c.h.b16 %v208
      %v974 = vunpack.c.l.b16 %v209
      %v975 = vunpack.c.h.b16 %v209
      %v976 = vunpack.c.l.b16 %v210
      %v977 = vunpack.c.h.b16 %v210
      %v978 = vunpack.c.l.b16 %v211
      %v979 = vunpack.c.h.b16 %v211
      %v980 = vunpack.c.l.b16 %v212
      %v981 = vunpack.c.h.b16 %v212
      %v982 = vunpack.c.l.b16 %v213
      %v983 = vunpack.c.h.b16 %v213
      %v984 = vunpack.c.l.b16 %v214
      %v985 = vunpack.c.h.b16 %v214
      %v986 = vunpack.c.l.b16 %v215
      %v987 = vunpack.c.h.b16 %v215
      %v988 = vunpack.c.l.b16 %v216
      %v989 = vunpack.c.h.b16 %v216
      %v990 = vunpack.c.l.b16 %v217
      %v991 = vunpack.c.h.b16 %v217
      %v992 = vunpack.c.l.b16 %v218
      %v993 = vunpack.c.h.b16 %v218
      %v994 = vunpack.c.l.b16 %v219
      %v995 = vunpack.c.h.b16 %v219
      %v996 = vunpack.c.l.b16 %v220
      %v997 = vunpack.c.h.b16 %v220
      %v998 = vunpack.c.l.b16 %v221
      %v999 = vunpack.c.h.b16 %v221
      %v1000 = vunpack.c.l.b16 %v222
      %v1001 = vunpack.c.h.b16 %v222
      %v1002 = vunpack.c.l.b16 %v223
      %v1003 = vunpack.c.h.b16 %v223
      %v1004 = vunpack.c.l.b16 %v224
      %v1005 = vunpack.c.h.b16 %v224
      %v1006 = vunpack.c.l.b16 %v225
      %v1007 = vunpack.c.h.b16 %v225
      %v1008 = vunpack.c.l.b16 %v226
      %v1009 = vunpack.c.h.b16 %v226
      %v1010 = vunpack.c.l.b16 %v227
      %v1011 = vunpack.c.h.b16 %v227
      %v1012 = vunpack.c.l.b16 %v228
      %v1013 = vunpack.c.h.b16 %v228
      %v1014 = vunpack.c.l.b16 %v229
      %v1015 = vunpack.c.h.b16 %v229
      %v1016 = vunpack.c.l.b16 %v230
      %v1017 = vunpack.c.h.b16 %v230
      %v1018 = vunpack.c.l.b16 %v231
      %v1019 = vunpack.c.h.b16 %v231
      %v1020 = vunpack.c.l.b16 %v232
      %v1021 = vunpack.c.h.b16 %v232
      %v1022 = vunpack.c.l.b16 %v233
      %v1023 = vunpack.c.h.b16 %v233
      %v1024 = vunpack.c.l.b16 %v234
      %v1025 = vunpack.c.h.b16 %v234
      %v1026 = vunpack.c.l.b16 %v235
      %v1027 = vunpack.c.h.b16 %v235
      %v1028 = vunpack.c.l.b16 %v236
      %v1029 = vunpack.c.h.b16 %v236
      %v1030 = vunpack.c.l.b16 %v237
      %v1031 = vunpack.c.h.b16 %v237
      %v1032 = vunpack.c.l.b16 %v238
      %v1033 = vunpack.c.h.b16 %v238
      %v1034 = vunpack.c.l.b16 %v239
      %v1035 = vunpack.c.h.b16 %v239
      %v1036 = vunpack.c.l.b16 %v240
      %v1037 = vunpack.c.h.b16 %v240
      %v1038 = vunpack.c.l.b16 %v241
      %v1039 = vunpack.c.h.b16 %v241
      %v1040 = vunpack.c.l.b16 %v242
      %v1041 = vunpack.c.h.b16 %v242
      %v1042 = vunpack.c.l.b16 %v243
      %v1043 = vunpack.c.h.b16 %v243
      %v1044 = vunpack.c.l.b16 %v244
      %v1045 = vunpack.c.h.b16 %v244
      %v1046 = vunpack.c.l.b16 %v245
      %v1047 = vunpack.c.h.b16 %v245
      %v1048 = vunpack.c.l.b16 %v246
      %v1049 = vunpack.c.h.b16 %v246
      %v1050 = vunpack.c.l.b16 %v247
      %v1051 = vunpack.c.h.b16 %v247
      %v1052 = vunpack.c.l.b16 %v248
      %v1053 = vunpack.c.h.b16 %v248
      %v1054 = vunpack.c.l.b16 %v249
      %v1055 = vunpack.c.h.b16 %v249
      %v1056 = vunpack.c.l.b16 %v250
      %v1057 = vunpack.c.h.b16 %v250
      %v1058 = vunpack.c.l.b16 %v251
      %v1059 = vunpack.c.h.b16 %v251
      %v1060 = vunpack.c.l.b16 %v252
      %v1061 = vunpack.c.h.b16 %v252
      %v1062 = vunpack.c.l.b16 %v253
      %v1063 = vunpack.c.h.b16 %v253
      %v1064 = vunpack.c.l.b16 %v254
      %v1065 = vunpack.c.h.b16 %v254
      %v1066 = vunpack.c.l.b16 %v255
      %v1067 = vunpack.c.h.b16 %v255
      %v1068 = vunpack.c.l.b16 %v256
      %v1069 = vunpack.c.h.b16 %v256
      %v1070 = vunpack.c.l.b16 %v257
      %v1071 = vunpack.c.h.b16 %v257
      %v1072 = vunpack.c.l.b16 %v258
      %v1073 = vunpack.c.h.b16 %v258
      %v1074 = vunpack.c.l.b16 %v259
      %v1075 = vunpack.c.h.b16 %v259
      %v1076 = vunpack.c.l.b16 %v260
      %v1077 = vunpack.c.h.b16 %v260
      %v1078 = vunpack.c.l.b16 %v261
      %v1079 = vunpack.c.h.b16 %v261
      %v1080 = vunpack.c.l.b16 %v262
      %v1081 = vunpack.c.h.b16 %v262
      %v1082 = vunpack.c.l.b16 %v263
      %v1083 = vunpack.c.h.b16 %v263
      %v1084 = vunpack.c.l.b16 %v264
      %v1085 = vunpack.c.h.b16 %v264
      %v1086 = vunpack.c.l.b16 %v265
      %v1087 = vunpack.c.h.b16 %v265
      %v1088 = vunpack.c.l.b16 %v266
      %v1089 = vunpack.c.h.b16 %v266
      %v1090 = vunpack.c.l.b16 %v267
      %v1091 = vunpack.c.h.b16 %v267
      %v1092 = vunpack.c.l.b16 %v268
      %v1093 = vunpack.c.h.b16 %v268
      %v1094 = vunpack.c.l.b16 %v269
      %v1095 = vunpack.c.h.b16 %v269
      %v1096 = vunpack.c.l.b16 %v270
      %v1097 = vunpack.c.h.b16 %v270
      %v1098 = vunpack.c.l.b16 %v271
      %v1099 = vunpack.c.h.b16 %v271
      %v1100 = vunpack.c.l.b16 %v272
      %v1101 = vunpack.c.h.b16 %v272
      %v1102 = vunpack.c.l.b16 %v273
      %v1103 = vunpack.c.h.b16 %v273
      %v1104 = vunpack.c.l.b16 %v274
      %v1105 = vunpack.c.h.b16 %v274
      %v1106 = vunpack.c.l.b16 %v275
      %v1107 = vunpack.c.h.b16 %v275
      %v1108 = vunpack.c.l.b16 %v276
      %v1109 = vunpack.c.h.b16 %v276
      %v1110 = vunpack.c.l.b16 %v277
      %v1111 = vunpack.c.h.b16 %v277
      %v1112 = vunpack.c.l.b16 %v278
      %v1113 = vunpack.c.h.b16 %v278
      %v1114 = vunpack.c.l.b16 %v279
      %v1115 = vunpack.c.h.b16 %v279
      %v1116 = vunpack.c.l.b16 %v280
      %v1117 = vunpack.c.h.b16 %v280
      %v1118 = vunpack.c.l.b16 %v281
      %v1119 = vunpack.c.h.b16 %v281
      %v1120 = vunpack.c.l.b16 %v282
      %v1121 = vunpack.c.h.b16 %v282
      %v1122 = vunpack.c.l.b16 %v283
      %v1123 = vunpack.c.h.b16 %v283
      %v1124 = vunpack.c.l.b16 %v284
      %v1125 = vunpack.c.h.b16 %v284
      %v1126 = vunpack.c.l.b16 %v285
      %v1127 = vunpack.c.h.b16 %v285
      %v1128 = vunpack.c.l.b16 %v286
      %v1129 = vunpack.c.h.b16 %v286
      %v1130 = vunpack.c.l.b16 %v287
      %v1131 = vunpack.c.h.b16 %v287
      %v1132 = vunpack.c.l.b16 %v288
      %v1133 = vunpack.c.h.b16 %v288
      %v1134 = vunpack.c.l.b16 %v289
      %v1135 = vunpack.c.h.b16 %v289
      %v1136 = vunpack.c.l.b16 %v290
      %v1137 = vunpack.c.h.b16 %v290
      %v1138 = vunpack.c.l.b16 %v291
      %v1139 = vunpack.c.h.b16 %v291
      %v1140 = vunpack.c.l.b16 %v292
      %v1141 = vunpack.c.h.b16 %v292
      %v1142 = vunpack.c.l.b16 %v293
      %v1143 = vunpack.c.h.b16 %v293
      %v1144 = vunpack.c.l.b16 %v294
      %v1145 = vunpack.c.h.b16 %v294
      %v1146 = vunpack.c.l.b16 %v295
      %v1147 = vunpack.c.h.b16 %v295
      %v1148 = vunpack.c.l.b16 %v296
      %v1149 = vunpack.c.h.b16 %v296
      %v1150 = vunpack.c.l.b16 %v297
      %v1151 = vunpack.c.h.b16 %v297
      %v1152 = vunpack.c.l.b16 %v298
      %v1153 = vunpack.c.h.b16 %v298
      %v1154 = vunpack.c.l.b16 %v299
      %v1155 = vunpack.c.h.b16 %v299
      %v1156 = vunpack.c.l.b16 %v300
      %v1157 = vunpack.c.h.b16 %v300
      %v1158 = vunpack.c.l.b16 %v301
      %v1159 = vunpack.c.h.b16 %v301
      %v1160 = vunpack.c.l.b16 %v302
      %v1161 = vunpack.c.h.b16 %v302
      %v1162 = vunpack.c.l.b16 %v303
      %v1163 = vunpack.c.h.b16 %v303
      %v1164 = vunpack.c.l.b16 %v304
      %v1165 = vunpack.c.h.b16 %v304
      %v1166 = vunpack.c.l.b16 %v305
      %v1167 = vunpack.c.h.b16 %v305
      %v1168 = vunpack.c.l.b16 %v306
      %v1169 = vunpack.c.h.b16 %v306
      %v1170 = vunpack.c.l.b16 %v307
      %v1171 = vunpack.c.h.b16 %v307
      %v1172 = vunpack.c.l.b16 %v308
      %v1173 = vunpack.c.h.b16 %v308
      %v1174 = vunpack.c.l.b16 %v309
      %v1175 = vunpack.c.h.b16 %v309
      %v1176 = vunpack.c.l.b16 %v310
      %v1177 = vunpack.c.h.b16 %v310
      %v1178 = vunpack.c.l.b16 %v311
      %v1179 = vunpack.c.h.b16 %v311
      %v1180 = vunpack.c.l.b16 %v312
      %v1181 = vunpack.c.h.b16 %v312
      %v1182 = vunpack.c.l.b16 %v313
      %v1183 = vunpack.c.h.b16 %v313
      %v1184 = vunpack.c.l.b16 %v314
      %v1185 = vunpack.c.h.b16 %v314
      %v1186 = vunpack.c.l.b16 %v315
      %v1187 = vunpack.c.h.b16 %v315
      %v1188 = vunpack.c.l.b16 %v316
      %v1189 = vunpack.c.h.b16 %v316
      %v1190 = vunpack.c.l.b16 %v317
      %v1191 = vunpack.c.h.b16 %v317
      %v1192 = vunpack.c.l.b16 %v318
      %v1193 = vunpack.c.h.b16 %v318
      %v1194 = vunpack.c.l.b16 %v319
      %v1195 = vunpack.c.h.b16 %v319
      %v1196 = vunpack.c.l.b16 %v320
      %v1197 = vunpack.c.h.b16 %v320
      %v1198 = vunpack.c.l.b16 %v321
      %v1199 = vunpack.c.h.b16 %v321
      %v1200 = vunpack.c.l.b16 %v322
      %v1201 = vunpack.c.h.b16 %v322
      %v1202 = vunpack.c.l.b16 %v323
      %v1203 = vunpack.c.h.b16 %v323
      %v1204 = vunpack.c.l.b16 %v324
      %v1205 = vunpack.c.h.b16 %v324
      %v1206 = vunpack.c.l.b16 %v325
      %v1207 = vunpack.c.h.b16 %v325
      %v1208 = vunpack.c.l.b16 %v326
      %v1209 = vunpack.c.h.b16 %v326
      %v1210 = vunpack.c.l.b16 %v327
      %v1211 = vunpack.c.h.b16 %v327
      %v1212 = vunpack.c.l.b16 %v328
      %v1213 = vunpack.c.h.b16 %v328
      %v1214 = vunpack.c.l.b16 %v329
      %v1215 = vunpack.c.h.b16 %v329
      %v1216 = vunpack.c.l.b16 %v330
      %v1217 = vunpack.c.h.b16 %v330
      %v1218 = vunpack.c.l.b16 %v331
      %v1219 = vunpack.c.h.b16 %v331
      %v1220 = vunpack.c.l.b16 %v332
      %v1221 = vunpack.c.h.b16 %v332
      %v1222 = vunpack.c.l.b16 %v333
      %v1223 = vunpack.c.h.b16 %v333
      %v1224 = vunpack.c.l.b16 %v334
      %v1225 = vunpack.c.h.b16 %v334
      %v1226 = vunpack.c.l.b16 %v335
      %v1227 = vunpack.c.h.b16 %v335
      %v1228 = vunpack.c.l.b16 %v336
      %v1229 = vunpack.c.h.b16 %v336
      %v1230 = vunpack.c.l.b16 %v337
      %v1231 = vunpack.c.h.b16 %v337
      %v1232 = vunpack.c.l.b16 %v338
      %v1233 = vunpack.c.h.b16 %v338
      %v1234 = vunpack.c.l.b16 %v339
      %v1235 = vunpack.c.h.b16 %v339
      %v1236 = vunpack.c.l.b16 %v340
      %v1237 = vunpack.c.h.b16 %v340
      %v1238 = vunpack.c.l.b16 %v341
      %v1239 = vunpack.c.h.b16 %v341
      %v1240 = vunpack.c.l.b16 %v342
      %v1241 = vunpack.c.h.b16 %v342
      %v1242 = vunpack.c.l.b16 %v343
      %v1243 = vunpack.c.h.b16 %v343
      %v1244 = vunpack.c.l.b16 %v344
      %v1245 = vunpack.c.h.b16 %v344
      %v1246 = vunpack.c.l.b16 %v345
      %v1247 = vunpack.c.h.b16 %v345
      %v1248 = vunpack.c.l.b16 %v346
      %v1249 = vunpack.c.h.b16 %v346
      %v1250 = vunpack.c.l.b16 %v347
      %v1251 = vunpack.c.h.b16 %v347
      %v1252 = vunpack.c.l.b16 %v348
      %v1253 = vunpack.c.h.b16 %v348
      %v1254 = vunpack.c.l.b16 %v349
      %v1255 = vunpack.c.h.b16 %v349
      %v1256 = vunpack.c.l.b16 %v350
      %v1257 = vunpack.c.h.b16 %v350
      %v1258 = vunpack.c.l.b16 %v351
      %v1259 = vunpack.c.h.b16 %v351
      %v1260 = vunpack.c.l.b16 %v352
      %v1261 = vunpack.c.h.b16 %v352
      %v1262 = vunpack.c.l.b16 %v353
      %v1263 = vunpack.c.h.b16 %v353
      %v1264 = vunpack.c.l.b16 %v354
      %v1265 = vunpack.c.h.b16 %v354
      %v1266 = vunpack.c.l.b16 %v355
      %v1267 = vunpack.c.h.b16 %v355
      %v1268 = vunpack.c.l.b16 %v356
      %v1269 = vunpack.c.h.b16 %v356
      %v1270 = vunpack.c.l.b16 %v357
      %v1271 = vunpack.c.h.b16 %v357
      %v1272 = vunpack.c.l.b16 %v358
      %v1273 = vunpack.c.h.b16 %v358
      %v1274 = vunpack.c.l.b16 %v359
      %v1275 = vunpack.c.h.b16 %v359
      %v1276 = vunpack.c.l.b16 %v360
      %v1277 = vunpack.c.h.b16 %v360
      %v1278 = vunpack.c.l.b16 %v361
      %v1279 = vunpack.c.h.b16 %v361
      %v1280 = vunpack.c.l.b16 %v362
      %v1281 = vunpack.c.h.b16 %v362
      %v1282 = vunpack.c.l.b16 %v363
      %v1283 = vunpack.c.h.b16 %v363
      %v1284 = vunpack.c.l.b16 %v364
      %v1285 = vunpack.c.h.b16 %v364
      %v1286 = vunpack.c.l.b16 %v365
      %v1287 = vunpack.c.h.b16 %v365
      %v1288 = vunpack.c.l.b16 %v366
      %v1289 = vunpack.c.h.b16 %v366
      %v1290 = vunpack.c.l.b16 %v367
      %v1291 = vunpack.c.h.b16 %v367
      %v1292 = vunpack.c.l.b16 %v368
      %v1293 = vunpack.c.h.b16 %v368
      %v1294 = vunpack.c.l.b16 %v369
      %v1295 = vunpack.c.h.b16 %v369
      %v1296 = vunpack.c.l.b16 %v370
      %v1297 = vunpack.c.h.b16 %v370
      %v1298 = vunpack.c.l.b16 %v371
      %v1299 = vunpack.c.h.b16 %v371
      %v1300 = vunpack.c.l.b16 %v372
      %v1301 = vunpack.c.h.b16 %v372
      %v1302 = vunpack.c.l.b16 %v373
      %v1303 = vunpack.c.h.b16 %v373
      %v1304 = vunpack.c.l.b16 %v374
      %v1305 = vunpack.c.h.b16 %v374
      %v1306 = vunpack.c.l.b16 %v375
      %v1307 = vunpack.c.h.b16 %v375
      %v1308 = vunpack.c.l.b16 %v376
      %v1309 = vunpack.c.h.b16 %v376
      %v1310 = vunpack.c.l.b16 %v377
      %v1311 = vunpack.c.h.b16 %v377
      %v1312 = vunpack.c.l.b16 %v378
      %v1313 = vunpack.c.h.b16 %v378
      %v1314 = vunpack.c.l.b16 %v379
      %v1315 = vunpack.c.h.b16 %v379
      %v1316 = vunpack.c.l.b16 %v380
      %v1317 = vunpack.c.h.b16 %v380
      %v1318 = vunpack.c.l.b16 %v381
      %v1319 = vunpack.c.h.b16 %v381
      %v1320 = vunpack.c.l.b16 %v382
      %v1321 = vunpack.c.h.b16 %v382
      %v1322 = vunpack.c.l.b16 %v383
      %v1323 = vunpack.c.h.b16 %v383
      %v1324 = vunpack.c.l.b16 %v384
      %v1325 = vunpack.c.h.b16 %v384
      %v1326 = vunpack.c.l.b16 %v385
      %v1327 = vunpack.c.h.b16 %v385
      %v1328 = vunpack.c.l.b16 %v386
      %v1329 = vunpack.c.h.b16 %v386
      %v1330 = vunpack.c.l.b16 %v387
      %v1331 = vunpack.c.h.b16 %v387
      %v1332 = vunpack.c.l.b16 %v388
      %v1333 = vunpack.c.h.b16 %v388
      %v1334 = vunpack.c.l.b16 %v389
      %v1335 = vunpack.c.h.b16 %v389
      %v1336 = vunpack.c.l.b16 %v390
      %v1337 = vunpack.c.h.b16 %v390
      %v1338 = vunpack.c.l.b16 %v391
      %v1339 = vunpack.c.h.b16 %v391
      %v1340 = vunpack.c.l.b16 %v392
      %v1341 = vunpack.c.h.b16 %v392
      %v1342 = vunpack.c.l.b16 %v393
      %v1343 = vunpack.c.h.b16 %v393
      %v1344 = vunpack.c.l.b16 %v394
      %v1345 = vunpack.c.h.b16 %v394
      %v1346 = vunpack.c.l.b16 %v395
      %v1347 = vunpack.c.h.b16 %v395
      %v1348 = vunpack.c.l.b16 %v396
      %v1349 = vunpack.c.h.b16 %v396
      %v1350 = vunpack.c.l.b16 %v397
      %v1351 = vunpack.c.h.b16 %v397
      %v1352 = vunpack.c.l.b16 %v398
      %v1353 = vunpack.c.h.b16 %v398
      %v1354 = vunpack.c.l.b16 %v399
      %v1355 = vunpack.c.h.b16 %v399
      %v1356 = vunpack.c.l.b16 %v400
      %v1357 = vunpack.c.h.b16 %v400
      %v1358 = vunpack.c.l.b16 %v401
      %v1359 = vunpack.c.h.b16 %v401
      %v1360 = vunpack.c.l.b16 %v402
      %v1361 = vunpack.c.h.b16 %v402
      %v1362 = vunpack.c.l.b16 %v403
      %v1363 = vunpack.c.h.b16 %v403
      %v1364 = vunpack.c.l.b16 %v404
      %v1365 = vunpack.c.h.b16 %v404
      %v1366 = vunpack.c.l.b16 %v405
      %v1367 = vunpack.c.h.b16 %v405
      %v1368 = vunpack.c.l.b16 %v406
      %v1369 = vunpack.c.h.b16 %v406
      %v1370 = vunpack.c.l.b16 %v407
      %v1371 = vunpack.c.h.b16 %v407
      %v1372 = vunpack.c.l.b16 %v408
      %v1373 = vunpack.c.h.b16 %v408
      %v1374 = vunpack.c.l.b16 %v409
      %v1375 = vunpack.c.h.b16 %v409
      %v1376 = vunpack.c.l.b16 %v410
      %v1377 = vunpack.c.h.b16 %v410
      %v1378 = vunpack.c.l.b16 %v411
      %v1379 = vunpack.c.h.b16 %v411
      %v1380 = vunpack.c.l.b16 %v412
      %v1381 = vunpack.c.h.b16 %v412
      %v1382 = vunpack.c.l.b16 %v413
      %v1383 = vunpack.c.h.b16 %v413
      %v1384 = vunpack.c.l.b16 %v414
      %v1385 = vunpack.c.h.b16 %v414
      %v1386 = vunpack.c.l.b16 %v415
      %v1387 = vunpack.c.h.b16 %v415
      %v1388 = vunpack.c.l.b16 %v416
      %v1389 = vunpack.c.h.b16 %v416
      %v1390 = vunpack.c.l.b16 %v417
      %v1391 = vunpack.c.h.b16 %v417
      %v1392 = vunpack.c.l.b16 %v418
      %v1393 = vunpack.c.h.b16 %v418
      %v1394 = vunpack.c.l.b16 %v419
      %v1395 = vunpack.c.h.b16 %v419
      %v1396 = vunpack.c.l.b16 %v420
      %v1397 = vunpack.c.h.b16 %v420
      %v1398 = vunpack.c.l.b16 %v421
      %v1399 = vunpack.c.h.b16 %v421
      %v1400 = vunpack.c.l.b16 %v422
      %v1401 = vunpack.c.h.b16 %v422
      %v1402 = vunpack.c.l.b16 %v423
      %v1403 = vunpack.c.h.b16 %v423
      %v1404 = vpack.c.b16 %v774, %v764
      %v1405 = vpack.c.b16 %v775, %v765
      %v1406 = vpack.c.b16 %v776, %v766
      %v1407 = vpack.c.b16 %v777, %v767
      %v1408 = vpack.c.b16 %v778, %v768
      %v1409 = vpack.c.b16 %v779, %v769
      %v1410 = vpack.c.b16 %v780, %v770
      %v1411 = vpack.c.b16 %v781, %v771
      %v1412 = vpack.c.b16 %v782, %v772
      %v1413 = vpack.c.b16 %v783, %v773
      %v1414 = vpack.c.b16 %v794, %v784
      %v1415 = vpack.c.b16 %v795, %v785
      %v1416 = vpack.c.b16 %v796, %v786
      %v1417 = vpack.c.b16 %v797, %v787
      %v1418 = vpack.c.b16 %v798, %v788
      %v1419 = vpack.c.b16 %v799, %v789
      %v1420 = vpack.c.b16 %v800, %v790
      %v1421 = vpack.c.b16 %v801, %v791
      %v1422 = vpack.c.b16 %v802, %v792
      %v1423 = vpack.c.b16 %v803, %v793
      %v1424 = vpack.c.b16 %v814, %v804
      %v1425 = vpack.c.b16 %v815, %v805
      %v1426 = vpack.c.b16 %v816, %v806
      %v1427 = vpack.c.b16 %v817, %v807
      %v1428 = vpack.c.b16 %v818, %v808
      %v1429 = vpack.c.b16 %v819, %v809
      %v1430 = vpack.c.b16 %v820, %v810
      %v1431 = vpack.c.b16 %v821, %v811
      %v1432 = vpack.c.b16 %v822, %v812
      %v1433 = vpack.c.b16 %v823, %v813
      %v1434 = vpack.c.b16 %v834, %v824
      %v1435 = vpack.c.b16 %v835, %v825
      %v1436 = vpack.c.b16 %v836, %v826
      %v1437 = vpack.c.b16 %v837, %v827
      %v1438 = vpack.c.b16 %v838, %v828
      %v1439 = vpack.c.b16 %v839, %v829
      %v1440 = vpack.c.b16 %v840, %v830
      %v1441 = vpack.c.b16 %v841, %v831
      %v1442 = vpack.c.b16 %v842, %v832
      %v1443 = vpack.c.b16 %v843, %v833
      %v1444 = vpack.c.b16 %v854, %v844
      %v1445 = vpack.c.b16 %v855, %v845
      %v1446 = vpack.c.b16 %v856, %v846
      %v1447 = vpack.c.b16 %v857, %v847
      %v1448 = vpack.c.b16 %v858, %v848
      %v1449 = vpack.c.b16 %v859, %v849
      %v1450 = vpack.c.b16 %v860, %v850
      %v1451 = vpack.c.b16 %v861, %v851
      %v1452 = vpack.c.b16 %v862, %v852
      %v1453 = vpack.c.b16 %v863, %v853
      %v1454 = vpack.c.b16 %v874, %v864
      %v1455 = vpack.c.b16 %v875, %v865
      %v1456 = vpack.c.b16 %v876, %v866
      %v1457 = vpack.c.b16 %v877, %v867
      %v1458 = vpack.c.b16 %v878, %v868
      %v1459 = vpack.c.b16 %v879, %v869
      %v1460 = vpack.c.b16 %v880, %v870
      %v1461 = vpack.c.b16 %v881, %v871
      %v1462 = vpack.c.b16 %v882, %v872
      %v1463 = vpack.c.b16 %v883, %v873
      %v1464 = vpack.c.b16 %v894, %v884
      %v1465 = vpack.c.b16 %v895, %v885
      %v1466 = vpack.c.b16 %v896, %v886
      %v1467 = vpack.c.b16 %v897, %v887
      %v1468 = vpack.c.b16 %v898, %v888
      %v1469 = vpack.c.b16 %v899, %v889
      %v1470 = vpack.c.b16 %v900, %v890
      %v1471 = vpack.c.b16 %v901, %v891
      %v1472 = vpack.c.b16 %v902, %v892
      %v1473 = vpack.c.b16 %v903, %v893
      %v1474 = vpack.c.b16 %v914, %v904
      %v1475 = vpack.c.b16 %v915, %v905
      %v1476 = vpack.c.b16 %v916, %v906
      %v1477 = vpack.c.b16 %v917, %v907
      %v1478 = vpack.c.b16 %v918, %v908
      %v1479 = vpack.c.b16 %v919, %v909
      %v1480 = vpack.c.b16 %v920, %v910
      %v1481 = vpack.c.b16 %v921, %v911
      %v1482 = vpack.c.b16 %v922, %v912
      %v1483 = vpack.c.b16 %v923, %v913
      %v1484 = vpack.c.b16 %v934, %v924
      %v1485 = vpack.c.b16 %v935, %v925
      %v1486 = vpack.c.b16 %v936, %v926
      %v1487 = vpack.c.b16 %v937, %v927
      %v1488 = vpack.c.b16 %v938, %v928
      %v1489 = vpack.c.b16 %v939, %v929
      %v1490 = vpack.c.b16 %v940, %v930
      %v1491 = vpack.c.b16 %v941, %v931
      %v1492 = vpack.c.b16 %v942, %v932
      %v1493 = vpack.c.b16 %v943, %v933
      %v1494 = vpack.c.b16 %v954, %v944
      %v1495 = vpack.c.b16 %v955, %v945
      %v1496 = vpack.c.b16 %v956, %v946
      %v1497 = vpack.c.b16 %v957, %v947
      %v1498 = vpack.c.b16 %v958, %v948
      %v1499 = vpack.c.b16 %v959, %v949
      %v1500 = vpack.c.b16 %v960, %v950
      %v1501 = vpack.c.b16 %v961, %v951
      %v1502 = vpack.c.b16 %v962, %v952
      %v1503 = vpack.c.b16 %v963, %v953
      %v1504 = vpack.c.b16 %v974, %v964
      %v1505 = vpack.c.b16 %v975, %v965
      %v1506 = vpack.c.b16 %v976, %v966
      %v1507 = vpack.c.b16 %v977, %v967
      %v1508 = vpack.c.b16 %v978, %v968
      %v1509 = vpack.c.b16 %v979, %v969
      %v1510 = vpack.c.b16 %v980, %v970
      %v1511 = vpack.c.b16 %v981, %v971
      %v1512 = vpack.c.b16 %v982, %v972
      %v1513 = vpack.c.b16 %v983, %v973
      %v1514 = vpack.c.b16 %v994, %v984
      %v1515 = vpack.c.b16 %v995, %v985
      %v1516 = vpack.c.b16 %v996, %v986
      %v1517 = vpack.c.b16 %v997, %v987
      %v1518 = vpack.c.b16 %v998, %v988
      %v1519 = vpack.c.b16 %v999, %v989
      %v1520 = vpack.c.b16 %v1000, %v990
      %v1521 = vpack.c.b16 %v1001, %v991
      %v1522 = vpack.c.b16 %v1002, %v992
      %v1523 = vpack.c.b16 %v1003, %v993
      %v1524 = vpack.c.b16 %v1014, %v1004
      %v1525 = vpack.c.b16 %v1015, %v1005
      %v1526 = vpack.c.b16 %v1016, %v1006
      %v1527 = vpack.c.b16 %v1017, %v1007
      %v1528 = vpack.c.b16 %v1018, %v1008
      %v1529 = vpack.c.b16 %v1019, %v1009
      %v1530 = vpack.c.b16 %v1020, %v1010
      %v1531 = vpack.c.b16 %v1021, %v1011
      %v1532 = vpack.c.b16 %v1022, %v1012
      %v1533 = vpack.c.b16 %v1023, %v1013
      %v1534 = vpack.c.b16 %v1034, %v1024
      %v1535 = vpack.c.b16 %v1035, %v1025
      %v1536 = vpack.c.b16 %v1036, %v1026
      %v1537 = vpack.c.b16 %v1037, %v1027
      %v1538 = vpack.c.b16 %v1038, %v1028
      %v1539 = vpack.c.b16 %v1039, %v1029
      %v1540 = vpack.c.b16 %v1040, %v1030
      %v1541 = vpack.c.b16 %v1041, %v1031
      %v1542 = vpack.c.b16 %v1042, %v1032
      %v1543 = vpack.c.b16 %v1043, %v1033
      %v1544 = vpack.c.b16 %v1054, %v1044
      %v1545 = vpack.c.b16 %v1055, %v1045
      %v1546 = vpack.c.b16 %v1056, %v1046
      %v1547 = vpack.c.b16 %v1057, %v1047
      %v1548 = vpack.c.b16 %v1058, %v1048
      %v1549 = vpack.c.b16 %v1059, %v1049
      %v1550 = vpack.c.b16 %v1060, %v1050
      %v1551 = vpack.c.b16 %v1061, %v1051
      %v1552 = vpack.c.b16 %v1062, %v1052
      %v1553 = vpack.c.b16 %v1063, %v1053
      %v1554 = vpack.c.b16 %v1074, %v1064
      %v1555 = vpack.c.b16 %v1075, %v1065
      %v1556 = vpack.c.b16 %v1076, %v1066
      %v1557 = vpack.c.b16 %v1077, %v1067
      %v1558 = vpack.c.b16 %v1078, %v1068
      %v1559 = vpack.c.b16 %v1079, %v1069
      %v1560 = vpack.c.b16 %v1080, %v1070
      %v1561 = vpack.c.b16 %v1081, %v1071
      %v1562 = vpack.c.b16 %v1082, %v1072
      %v1563 = vpack.c.b16 %v1083, %v1073
      %v1564 = vpack.c.b16 %v1094, %v1084
      %v1565 = vpack.c.b16 %v1095, %v1085
      %v1566 = vpack.c.b16 %v1096, %v1086
      %v1567 = vpack.c.b16 %v1097, %v1087
      %v1568 = vpack.c.b16 %v1098, %v1088
      %v1569 = vpack.c.b16 %v1099, %v1089
      %v1570 = vpack.c.b16 %v1100, %v1090
      %v1571 = vpack.c.b16 %v1101, %v1091
      %v1572 = vpack.c.b16 %v1102, %v1092
      %v1573 = vpack.c.b16 %v1103, %v1093
      %v1574 = vpack.c.b16 %v1114, %v1104
      %v1575 = vpack.c.b16 %v1115, %v1105
      %v1576 = vpack.c.b16 %v1116, %v1106
      %v1577 = vpack.c.b16 %v1117, %v1107
      %v1578 = vpack.c.b16 %v1118, %v1108
      %v1579 = vpack.c.b16 %v1119, %v1109
      %v1580 = vpack.c.b16 %v1120, %v1110
      %v1581 = vpack.c.b16 %v1121, %v1111
      %v1582 = vpack.c.b16 %v1122, %v1112
      %v1583 = vpack.c.b16 %v1123, %v1113
      %v1584 = vpack.c.b16 %v1134, %v1124
      %v1585 = vpack.c.b16 %v1135, %v1125
      %v1586 = vpack.c.b16 %v1136, %v1126
      %v1587 = vpack.c.b16 %v1137, %v1127
      %v1588 = vpack.c.b16 %v1138, %v1128
      %v1589 = vpack.c.b16 %v1139, %v1129
      %v1590 = vpack.c.b16 %v1140, %v1130
      %v1591 = vpack.c.b16 %v1141, %v1131
      %v1592 = vpack.c.b16 %v1142, %v1132
      %v1593 = vpack.c.b16 %v1143, %v1133
      %v1594 = vpack.c.b16 %v1154, %v1144
      %v1595 = vpack.c.b16 %v1155, %v1145
      %v1596 = vpack.c.b16 %v1156, %v1146
      %v1597 = vpack.c.b16 %v1157, %v1147
      %v1598 = vpack.c.b16 %v1158, %v1148
      %v1599 = vpack.c.b16 %v1159, %v1149
      %v1600 = vpack.c.b16 %v1160, %v1150
      %v1601 = vpack.c.b16 %v1161, %v1151
      %v1602 = vpack.c.b16 %v1162, %v1152
      %v1603 = vpack.c.b16 %v1163, %v1153
      %v1604 = vpack.c.b16 %v1174, %v1164
      %v1605 = vpack.c.b16 %v1175, %v1165
      %v1606 = vpack.c.b16 %v1176, %v1166
      %v1607 = vpack.c.b16 %v1177, %v1167
      %v1608 = vpack.c.b16 %v1178, %v1168
      %v1609 = vpack.c.b16 %v1179, %v1169
      %v1610 = vpack.c.b16 %v1180, %v1170
      %v1611 = vpack.c.b16 %v1181, %v1171
      %v1612 = vpack.c.b16 %v1182, %v1172
      %v1613 = vpack.c.b16 %v1183, %v1173
      %v1614 = vpack.c.b16 %v1194, %v1184
      %v1615 = vpack.c.b16 %v1195, %v1185
      %v1616 = vpack.c.b16 %v1196, %v1186
      %v1617 = vpack.c.b16 %v1197, %v1187
      %v1618 = vpack.c.b16 %v1198, %v1188
      %v1619 = vpack.c.b16 %v1199, %v1189
      %v1620 = vpack.c.b16 %v1200, %v1190
      %v1621 = vpack.c.b16 %v1201, %v1191
      %v1622 = vpack.c.b16 %v1202, %v1192
      %v1623 = vpack.c.b16 %v1203, %v1193
      %v1624 = vpack.c.b16 %v1214, %v1204
      %v1625 = vpack.c.b16 %v1215, %v1205
      %v1626 = vpack.c.b16 %v1216, %v1206
      %v1627 = vpack.c.b16 %v1217, %v1207
      %v1628 = vpack.c.b16 %v1218, %v1208
      %v1629 = vpack.c.b16 %v1219, %v1209
      %v1630 = vpack.c.b16 %v1220, %v1210
      %v1631 = vpack.c.b16 %v1221, %v1211
      %v1632 = vpack.c.b16 %v1222, %v1212
      %v1633 = vpack.c.b16 %v1223, %v1213
      %v1634 = vpack.c.b16 %v1234, %v1224
      %v1635 = vpack.c.b16 %v1235, %v1225
      %v1636 = vpack.c.b16 %v1236, %v1226
      %v1637 = vpack.c.b16 %v1237, %v1227
      %v1638 = vpack.c.b16 %v1238, %v1228
      %v1639 = vpack.c.b16 %v1239, %v1229
      %v1640 = vpack.c.b16 %v1240, %v1230
      %v1641 = vpack.c.b16 %v1241, %v1231
      %v1642 = vpack.c.b16 %v1242, %v1232
      %v1643 = vpack.c.b16 %v1243, %v1233
      %v1644 = vpack.c.b16 %v1254, %v1244
      %v1645 = vpack.c.b16 %v1255, %v1245
      %v1646 = vpack.c.b16 %v1256, %v1246
      %v1647 = vpack.c.b16 %v1257, %v1247
      %v1648 = vpack.c.b16 %v1258, %v1248
      %v1649 = vpack.c.b16 %v1259, %v1249
      %v1650 = vpack.c.b16 %v1260, %v1250
      %v1651 = vpack.c.b16 %v1261, %v1251
      %v1652 = vpack.c.b16 %v1262, %v1252
      %v1653 = vpack.c.b16 %v1263, %v1253
      %v1654 = vpack.c.b16 %v1274, %v1264
      %v1655 = vpack.c.b16 %v1275, %v1265
      %v1656 = vpack.c.b16 %v1276, %v1266
      %v1657 = vpack.c.b16 %v1277, %v1267
      %v1658 = vpack.c.b16 %v1278, %v1268
      %v1659 = vpack.c.b16 %v1279, %v1269
      %v1660 = vpack.c.b16 %v1280, %v1270
      %v1661 = vpack.c.b16 %v1281, %v1271
      %v1662 = vpack.c.b16 %v1282, %v1272
      %v1663 = vpack.c.b16 %v1283, %v1273
      %v1664 = vpack.c.b16 %v1294, %v1284
      %v1665 = vpack.c.b16 %v1295, %v1285
      %v1666 = vpack.c.b16 %v1296, %v1286
      %v1667 = vpack.c.b16 %v1297, %v1287
      %v1668 = vpack.c.b16 %v1298, %v1288
      %v1669 = vpack.c.b16 %v1299, %v1289
      %v1670 = vpack.c.b16 %v1300, %v1290
      %v1671 = vpack.c.b16 %v1301, %v1291
      %v1672 = vpack.c.b16 %v1302, %v1292
      %v1673 = vpack.c.b16 %v1303, %v1293
      %v1674 = vpack.c.b16 %v1314, %v1304
      %v1675 = vpack.c.b16 %v1315, %v1305
      %v1676 = vpack.c.b16 %v1316, %v1306
      %v1677 = vpack.c.b16 %v1317, %v1307
      %v1678 = vpack.c.b16 %v1318, %v1308
      %v1679 = vpack.c.b16 %v1319, %v1309
      %v1680 = vpack.c.b16 %v1320, %v1310
      %v1681 = vpack.c.b16 %v1321, %v1311
      %v1682 = vpack.c.b16 %v1322, %v1312
      %v1683 = vpack.c.b16 %v1323, %v1313
      %v1684 = vpack.c.b16 %v1334, %v1324
      %v1685 = vpack.c.b16 %v1335, %v1325
      %v1686 = vpack.c.b16 %v1336, %v1326
      %v1687 = vpack.c.b16 %v1337, %v1327
      %v1688 = vpack.c.b16 %v1338, %v1328
      %v1689 = vpack.c.b16 %v1339, %v1329
      %v1690 = vpack.c.b16 %v1340, %v1330
      %v1691 = vpack.c.b16 %v1341, %v1331
      %v1692 = vpack.c.b16 %v1342, %v1332
      %v1693 = vpack.c.b16 %v1343, %v1333
      %v1694 = vpack.c.b16 %v1354, %v1344
      %v1695 = vpack.c.b16 %v1355, %v1345
      %v1696 = vpack.c.b16 %v1356, %v1346
      %v1697 = vpack.c.b16 %v1357, %v1347
      %v1698 = vpack.c.b16 %v1358, %v1348
      %v1699 = vpack.c.b16 %v1359, %v1349
      %v1700 = vpack.c.b16 %v1360, %v1350
      %v1701 = vpack.c.b16 %v1361, %v1351
      %v1702 = vpack.c.b16 %v1362, %v1352
      %v1703 = vpack.c.b16 %v1363, %v1353
      %v1704 = vpack.c.b16 %v1374, %v1364
      %v1705 = vpack.c.b16 %v1375, %v1365
      %v1706 = vpack.c.b16 %v1376, %v1366
      %v1707 = vpack.c.b16 %v1377, %v1367
      %v1708 = vpack.c.b16 %v1378, %v1368
      %v1709 = vpack.c.b16 %v1379, %v1369
      %v1710 = vpack.c.b16 %v1380, %v1370
      %v1711 = vpack.c.b16 %v1381, %v1371
      %v1712 = vpack.c.b16 %v1382, %v1372
      %v1713 = vpack.c.b16 %v1383, %v1373
      %v1714 = vpack.c.b16 %v1394, %v1384
      %v1715 = vpack.c.b16 %v1395, %v1385
      %v1716 = vpack.c.b16 %v1396, %v1386
      %v1717 = vpack.c.b16 %v1397, %v1387
      %v1718 = vpack.c.b16 %v1398, %v1388
      %v1719 = vpack.c.b16 %v1399, %v1389
      %v1720 = vpack.c.b16 %v1400, %v1390
      %v1721 = vpack.c.b16 %v1401, %v1391
      %v1722 = vpack.c.b16 %v1402, %v1392
      %v1723 = vpack.c.b16 %v1403, %v1393
      %2044 = vmatprep.subr.bf16.mxu0 %v1405
      %2045 = vmatpush1.bf16.msra.mxu0 %v1404
      %2046 = vmatprep.subr.bf16.mxu0 %v1415
      %2047 = vmatpush1.bf16.msra.mxu0 %v1414
      %2048 = vmatprep.subr.bf16.mxu0 %v1425
      %2049 = vmatpush1.bf16.msra.mxu0 %v1424
      %2050 = vmatprep.subr.bf16.mxu0 %v1435
      %2051 = vmatpush1.bf16.msra.mxu0 %v1434
      %2052 = vmatprep.subr.bf16.mxu0 %v1445
      %2053 = vmatpush1.bf16.msra.mxu0 %v1444
      %2054 = vmatprep.subr.bf16.mxu0 %v1455
      %2055 = vmatpush1.bf16.msra.mxu0 %v1454
      %2056 = vmatprep.subr.bf16.mxu0 %v1465
      %2057 = vmatpush1.bf16.msra.mxu0 %v1464
      %2058 = vmatprep.subr.bf16.mxu0 %v1475
      %2059 = vmatpush1.bf16.msra.mxu0 %v1474
      %2060 = vmatprep.subr.bf16.mxu0 %v1485
      %2061 = vmatpush1.bf16.msra.mxu0 %v1484
      %2062 = vmatprep.subr.bf16.mxu0 %v1495
      %2063 = vmatpush1.bf16.msra.mxu0 %v1494
      %2064 = vmatprep.subr.bf16.mxu0 %v1505
      %2065 = vmatpush1.bf16.msra.mxu0 %v1504
      %2066 = vmatprep.subr.bf16.mxu0 %v1515
      %2067 = vmatpush1.bf16.msra.mxu0 %v1514
      %2068 = vmatprep.subr.bf16.mxu0 %v1525
      %2069 = vmatpush1.bf16.msra.mxu0 %v1524
      %2070 = vmatprep.subr.bf16.mxu0 %v1535
      %2071 = vmatpush1.bf16.msra.mxu0 %v1534
      %2072 = vmatprep.subr.bf16.mxu0 %v1545
      %2073 = vmatpush1.bf16.msra.mxu0 %v1544
      %2074 = vmatprep.subr.bf16.mxu0 %v1555
      %2075 = vmatpush1.bf16.msra.mxu0 %v1554
      %2076 = vmatprep.mubr.bf16.mxu0 %v437
      %2077 = vmatmul.mubr.bf16.gmra.mrb[0].mxu0 %v436
      %v2078 = vpop.f32.mrb[0].mxu0
      %v2079 = vadd.f32 0.0, %v2078
      %v2080 = vpop.f32.mrb[0].mxu0
      %v2081 = vadd.f32 0.0, %v2080
      %v2082 = vpop.f32.mrb[0].mxu0
      %v2083 = vadd.f32 0.0, %v2082
      %v2084 = vpop.f32.mrb[0].mxu0
      %v2085 = vadd.f32 0.0, %v2084
      %2086 = vdwg.mxu0
      %2087 = vmatprep.subr.bf16.mxu0 %v1565
      %2088 = vmatpush1.bf16.msra.mxu0 %v1564
      %2089 = vmatprep.subr.bf16.mxu0 %v1575
      %2090 = vmatpush1.bf16.msra.mxu0 %v1574
      %2091 = vmatprep.subr.bf16.mxu0 %v1585
      %2092 = vmatpush1.bf16.msra.mxu0 %v1584
      %2093 = vmatprep.subr.bf16.mxu0 %v1595
      %2094 = vmatpush1.bf16.msra.mxu0 %v1594
      %2095 = vmatprep.subr.bf16.mxu0 %v1605
      %2096 = vmatpush1.bf16.msra.mxu0 %v1604
      %2097 = vmatprep.subr.bf16.mxu0 %v1615
      %2098 = vmatpush1.bf16.msra.mxu0 %v1614
      %2099 = vmatprep.subr.bf16.mxu0 %v1625
      %2100 = vmatpush1.bf16.msra.mxu0 %v1624
      %2101 = vmatprep.subr.bf16.mxu0 %v1635
      %2102 = vmatpush1.bf16.msra.mxu0 %v1634
      %2103 = vmatprep.subr.bf16.mxu0 %v1645
      %2104 = vmatpush1.bf16.msra.mxu0 %v1644
      %2105 = vmatprep.subr.bf16.mxu0 %v1655
      %2106 = vmatpush1.bf16.msra.mxu0 %v1654
      %2107 = vmatprep.subr.bf16.mxu0 %v1665
      %2108 = vmatpush1.bf16.msra.mxu0 %v1664
      %2109 = vmatprep.subr.bf16.mxu0 %v1675
      %2110 = vmatpush1.bf16.msra.mxu0 %v1674
      %2111 = vmatprep.subr.bf16.mxu0 %v1685
      %2112 = vmatpush1.bf16.msra.mxu0 %v1684
      %2113 = vmatprep.subr.bf16.mxu0 %v1695
      %2114 = vmatpush1.bf16.msra.mxu0 %v1694
      %2115 = vmatprep.subr.bf16.mxu0 %v1705
      %2116 = vmatpush1.bf16.msra.mxu0 %v1704
      %2117 = vmatprep.subr.bf16.mxu0 %v1715
      %2118 = vmatpush1.bf16.msra.mxu0 %v1714
      %2119 = vmatprep.mubr.bf16.mxu0 %v439
      %2120 = vmatmul.mubr.bf16.gmra.mrb[0].mxu0 %v438
      %v2121 = vpop.f32.mrb[0].mxu0
      %v2122 = vadd.f32 %v2079, %v2121
      %v2123 = vpop.f32.mrb[0].mxu0
      %v2124 = vadd.f32 %v2081, %v2123
      %v2125 = vpop.f32.mrb[0].mxu0
      %v2126 = vadd.f32 %v2083, %v2125
      %v2127 = vpop.f32.mrb[0].mxu0
      %v2128 = vadd.f32 %v2085, %v2127
      %2129 = vdwg.mxu0
      %2130 = vmatprep.subr.bf16.mxu0 %v1407
      %2131 = vmatpush1.bf16.msra.mxu0 %v1406
      %2132 = vmatprep.subr.bf16.mxu0 %v1417
      %2133 = vmatpush1.bf16.msra.mxu0 %v1416
      %2134 = vmatprep.subr.bf16.mxu0 %v1427
      %2135 = vmatpush1.bf16.msra.mxu0 %v1426
      %2136 = vmatprep.subr.bf16.mxu0 %v1437
      %2137 = vmatpush1.bf16.msra.mxu0 %v1436
      %2138 = vmatprep.subr.bf16.mxu0 %v1447
      %2139 = vmatpush1.bf16.msra.mxu0 %v1446
      %2140 = vmatprep.subr.bf16.mxu0 %v1457
      %2141 = vmatpush1.bf16.msra.mxu0 %v1456
      %2142 = vmatprep.subr.bf16.mxu0 %v1467
      %2143 = vmatpush1.bf16.msra.mxu0 %v1466
      %2144 = vmatprep.subr.bf16.mxu0 %v1477
      %2145 = vmatpush1.bf16.msra.mxu0 %v1476
      %2146 = vmatprep.subr.bf16.mxu0 %v1487
      %2147 = vmatpush1.bf16.msra.mxu0 %v1486
      %2148 = vmatprep.subr.bf16.mxu0 %v1497
      %2149 = vmatpush1.bf16.msra.mxu0 %v1496
      %2150 = vmatprep.subr.bf16.mxu0 %v1507
      %2151 = vmatpush1.bf16.msra.mxu0 %v1506
      %2152 = vmatprep.subr.bf16.mxu0 %v1517
      %2153 = vmatpush1.bf16.msra.mxu0 %v1516
      %2154 = vmatprep.subr.bf16.mxu0 %v1527
      %2155 = vmatpush1.bf16.msra.mxu0 %v1526
      %2156 = vmatprep.subr.bf16.mxu0 %v1537
      %2157 = vmatpush1.bf16.msra.mxu0 %v1536
      %2158 = vmatprep.subr.bf16.mxu0 %v1547
      %2159 = vmatpush1.bf16.msra.mxu0 %v1546
      %2160 = vmatprep.subr.bf16.mxu0 %v1557
      %2161 = vmatpush1.bf16.msra.mxu0 %v1556
      %2162 = vmatprep.mubr.bf16.mxu0 %v437
      %2163 = vmatmul.mubr.bf16.gmra.mrb[0].mxu0 %v436
      %v2164 = vpop.f32.mrb[0].mxu0
      %v2165 = vadd.f32 0.0, %v2164
      %v2166 = vpop.f32.mrb[0].mxu0
      %v2167 = vadd.f32 0.0, %v2166
      %v2168 = vpop.f32.mrb[0].mxu0
      %v2169 = vadd.f32 0.0, %v2168
      %v2170 = vpop.f32.mrb[0].mxu0
      %v2171 = vadd.f32 0.0, %v2170
      %2172 = vdwg.mxu0
      %2173 = vmatprep.subr.bf16.mxu0 %v1567
      %2174 = vmatpush1.bf16.msra.mxu0 %v1566
      %2175 = vmatprep.subr.bf16.mxu0 %v1577
      %2176 = vmatpush1.bf16.msra.mxu0 %v1576
      %2177 = vmatprep.subr.bf16.mxu0 %v1587
      %2178 = vmatpush1.bf16.msra.mxu0 %v1586
      %2179 = vmatprep.subr.bf16.mxu0 %v1597
      %2180 = vmatpush1.bf16.msra.mxu0 %v1596
      %2181 = vmatprep.subr.bf16.mxu0 %v1607
      %2182 = vmatpush1.bf16.msra.mxu0 %v1606
      %2183 = vmatprep.subr.bf16.mxu0 %v1617
      %2184 = vmatpush1.bf16.msra.mxu0 %v1616
      %2185 = vmatprep.subr.bf16.mxu0 %v1627
      %2186 = vmatpush1.bf16.msra.mxu0 %v1626
      %2187 = vmatprep.subr.bf16.mxu0 %v1637
      %2188 = vmatpush1.bf16.msra.mxu0 %v1636
      %2189 = vmatprep.subr.bf16.mxu0 %v1647
      %2190 = vmatpush1.bf16.msra.mxu0 %v1646
      %2191 = vmatprep.subr.bf16.mxu0 %v1657
      %2192 = vmatpush1.bf16.msra.mxu0 %v1656
      %2193 = vmatprep.subr.bf16.mxu0 %v1667
      %2194 = vmatpush1.bf16.msra.mxu0 %v1666
      %2195 = vmatprep.subr.bf16.mxu0 %v1677
      %2196 = vmatpush1.bf16.msra.mxu0 %v1676
      %2197 = vmatprep.subr.bf16.mxu0 %v1687
      %2198 = vmatpush1.bf16.msra.mxu0 %v1686
      %2199 = vmatprep.subr.bf16.mxu0 %v1697
      %2200 = vmatpush1.bf16.msra.mxu0 %v1696
      %2201 = vmatprep.subr.bf16.mxu0 %v1707
      %2202 = vmatpush1.bf16.msra.mxu0 %v1706
      %2203 = vmatprep.subr.bf16.mxu0 %v1717
      %2204 = vmatpush1.bf16.msra.mxu0 %v1716
      %2205 = vmatprep.mubr.bf16.mxu0 %v439
      %2206 = vmatmul.mubr.bf16.gmra.mrb[0].mxu0 %v438
      %v2207 = vpop.f32.mrb[0].mxu0
      %v2208 = vadd.f32 %v2165, %v2207
      %v2209 = vpop.f32.mrb[0].mxu0
      %v2210 = vadd.f32 %v2167, %v2209
      %v2211 = vpop.f32.mrb[0].mxu0
      %v2212 = vadd.f32 %v2169, %v2211
      %v2213 = vpop.f32.mrb[0].mxu0
      %v2214 = vadd.f32 %v2171, %v2213
      %2215 = vdwg.mxu0
      %2216 = vmatprep.subr.bf16.mxu0 %v1409
      %2217 = vmatpush1.bf16.msra.mxu0 %v1408
      %2218 = vmatprep.subr.bf16.mxu0 %v1419
      %2219 = vmatpush1.bf16.msra.mxu0 %v1418
      %2220 = vmatprep.subr.bf16.mxu0 %v1429
      %2221 = vmatpush1.bf16.msra.mxu0 %v1428
      %2222 = vmatprep.subr.bf16.mxu0 %v1439
      %2223 = vmatpush1.bf16.msra.mxu0 %v1438
      %2224 = vmatprep.subr.bf16.mxu0 %v1449
      %2225 = vmatpush1.bf16.msra.mxu0 %v1448
      %2226 = vmatprep.subr.bf16.mxu0 %v1459
      %2227 = vmatpush1.bf16.msra.mxu0 %v1458
      %2228 = vmatprep.subr.bf16.mxu0 %v1469
      %2229 = vmatpush1.bf16.msra.mxu0 %v1468
      %2230 = vmatprep.subr.bf16.mxu0 %v1479
      %2231 = vmatpush1.bf16.msra.mxu0 %v1478
      %2232 = vmatprep.subr.bf16.mxu0 %v1489
      %2233 = vmatpush1.bf16.msra.mxu0 %v1488
      %2234 = vmatprep.subr.bf16.mxu0 %v1499
      %2235 = vmatpush1.bf16.msra.mxu0 %v1498
      %2236 = vmatprep.subr.bf16.mxu0 %v1509
      %2237 = vmatpush1.bf16.msra.mxu0 %v1508
      %2238 = vmatprep.subr.bf16.mxu0 %v1519
      %2239 = vmatpush1.bf16.msra.mxu0 %v1518
      %2240 = vmatprep.subr.bf16.mxu0 %v1529
      %2241 = vmatpush1.bf16.msra.mxu0 %v1528
      %2242 = vmatprep.subr.bf16.mxu0 %v1539
      %2243 = vmatpush1.bf16.msra.mxu0 %v1538
      %2244 = vmatprep.subr.bf16.mxu0 %v1549
      %2245 = vmatpush1.bf16.msra.mxu0 %v1548
      %2246 = vmatprep.subr.bf16.mxu0 %v1559
      %2247 = vmatpush1.bf16.msra.mxu0 %v1558
      %2248 = vmatprep.mubr.bf16.mxu0 %v437
      %2249 = vmatmul.mubr.bf16.gmra.mrb[0].mxu0 %v436
      %v2250 = vpop.f32.mrb[0].mxu0
      %v2251 = vadd.f32 0.0, %v2250
      %v2252 = vpop.f32.mrb[0].mxu0
      %v2253 = vadd.f32 0.0, %v2252
      %v2254 = vpop.f32.mrb[0].mxu0
      %v2255 = vadd.f32 0.0, %v2254
      %v2256 = vpop.f32.mrb[0].mxu0
      %v2257 = vadd.f32 0.0, %v2256
      %2258 = vdwg.mxu0
      %2259 = vmatprep.subr.bf16.mxu0 %v1569
      %2260 = vmatpush1.bf16.msra.mxu0 %v1568
      %2261 = vmatprep.subr.bf16.mxu0 %v1579
      %2262 = vmatpush1.bf16.msra.mxu0 %v1578
      %2263 = vmatprep.subr.bf16.mxu0 %v1589
      %2264 = vmatpush1.bf16.msra.mxu0 %v1588
      %2265 = vmatprep.subr.bf16.mxu0 %v1599
      %2266 = vmatpush1.bf16.msra.mxu0 %v1598
      %2267 = vmatprep.subr.bf16.mxu0 %v1609
      %2268 = vmatpush1.bf16.msra.mxu0 %v1608
      %2269 = vmatprep.subr.bf16.mxu0 %v1619
      %2270 = vmatpush1.bf16.msra.mxu0 %v1618
      %2271 = vmatprep.subr.bf16.mxu0 %v1629
      %2272 = vmatpush1.bf16.msra.mxu0 %v1628
      %2273 = vmatprep.subr.bf16.mxu0 %v1639
      %2274 = vmatpush1.bf16.msra.mxu0 %v1638
      %2275 = vmatprep.subr.bf16.mxu0 %v1649
      %2276 = vmatpush1.bf16.msra.mxu0 %v1648
      %2277 = vmatprep.subr.bf16.mxu0 %v1659
      %2278 = vmatpush1.bf16.msra.mxu0 %v1658
      %2279 = vmatprep.subr.bf16.mxu0 %v1669
      %2280 = vmatpush1.bf16.msra.mxu0 %v1668
      %2281 = vmatprep.subr.bf16.mxu0 %v1679
      %2282 = vmatpush1.bf16.msra.mxu0 %v1678
      %2283 = vmatprep.subr.bf16.mxu0 %v1689
      %2284 = vmatpush1.bf16.msra.mxu0 %v1688
      %2285 = vmatprep.subr.bf16.mxu0 %v1699
      %2286 = vmatpush1.bf16.msra.mxu0 %v1698
      %2287 = vmatprep.subr.bf16.mxu0 %v1709
      %2288 = vmatpush1.bf16.msra.mxu0 %v1708
      %2289 = vmatprep.subr.bf16.mxu0 %v1719
      %2290 = vmatpush1.bf16.msra.mxu0 %v1718
      %2291 = vmatprep.mubr.bf16.mxu0 %v439
      %2292 = vmatmul.mubr.bf16.gmra.mrb[0].mxu0 %v438
      %v2293 = vpop.f32.mrb[0].mxu0
      %v2294 = vadd.f32 %v2251, %v2293
      %v2295 = vpop.f32.mrb[0].mxu0
      %v2296 = vadd.f32 %v2253, %v2295
      %v2297 = vpop.f32.mrb[0].mxu0
      %v2298 = vadd.f32 %v2255, %v2297
      %v2299 = vpop.f32.mrb[0].mxu0
      %v2300 = vadd.f32 %v2257, %v2299
      %2301 = vdwg.mxu0
      %2302 = vmatprep.subr.bf16.mxu0 %v1411
      %2303 = vmatpush1.bf16.msra.mxu0 %v1410
      %2304 = vmatprep.subr.bf16.mxu0 %v1421
      %2305 = vmatpush1.bf16.msra.mxu0 %v1420
      %2306 = vmatprep.subr.bf16.mxu0 %v1431
      %2307 = vmatpush1.bf16.msra.mxu0 %v1430
      %2308 = vmatprep.subr.bf16.mxu0 %v1441
      %2309 = vmatpush1.bf16.msra.mxu0 %v1440
      %2310 = vmatprep.subr.bf16.mxu0 %v1451
      %2311 = vmatpush1.bf16.msra.mxu0 %v1450
      %2312 = vmatprep.subr.bf16.mxu0 %v1461
      %2313 = vmatpush1.bf16.msra.mxu0 %v1460
      %2314 = vmatprep.subr.bf16.mxu0 %v1471
      %2315 = vmatpush1.bf16.msra.mxu0 %v1470
      %2316 = vmatprep.subr.bf16.mxu0 %v1481
      %2317 = vmatpush1.bf16.msra.mxu0 %v1480
      %2318 = vmatprep.subr.bf16.mxu0 %v1491
      %2319 = vmatpush1.bf16.msra.mxu0 %v1490
      %2320 = vmatprep.subr.bf16.mxu0 %v1501
      %2321 = vmatpush1.bf16.msra.mxu0 %v1500
      %2322 = vmatprep.subr.bf16.mxu0 %v1511
      %2323 = vmatpush1.bf16.msra.mxu0 %v1510
      %2324 = vmatprep.subr.bf16.mxu0 %v1521
      %2325 = vmatpush1.bf16.msra.mxu0 %v1520
      %2326 = vmatprep.subr.bf16.mxu0 %v1531
      %2327 = vmatpush1.bf16.msra.mxu0 %v1530
      %2328 = vmatprep.subr.bf16.mxu0 %v1541
      %2329 = vmatpush1.bf16.msra.mxu0 %v1540
      %2330 = vmatprep.subr.bf16.mxu0 %v1551
      %2331 = vmatpush1.bf16.msra.mxu0 %v1550
      %2332 = vmatprep.subr.bf16.mxu0 %v1561
      %2333 = vmatpush1.bf16.msra.mxu0 %v1560
      %2334 = vmatprep.mubr.bf16.mxu0 %v437
      %2335 = vmatmul.mubr.bf16.gmra.mrb[0].mxu0 %v436
      %v2336 = vpop.f32.mrb[0].mxu0
      %v2337 = vadd.f32 0.0, %v2336
      %v2338 = vpop.f32.mrb[0].mxu0
      %v2339 = vadd.f32 0.0, %v2338
      %v2340 = vpop.f32.mrb[0].mxu0
      %v2341 = vadd.f32 0.0, %v2340
      %v2342 = vpop.f32.mrb[0].mxu0
      %v2343 = vadd.f32 0.0, %v2342
      %2344 = vdwg.mxu0
      %2345 = vmatprep.subr.bf16.mxu0 %v1571
      %2346 = vmatpush1.bf16.msra.mxu0 %v1570
      %2347 = vmatprep.subr.bf16.mxu0 %v1581
      %2348 = vmatpush1.bf16.msra.mxu0 %v1580
      %2349 = vmatprep.subr.bf16.mxu0 %v1591
      %2350 = vmatpush1.bf16.msra.mxu0 %v1590
      %2351 = vmatprep.subr.bf16.mxu0 %v1601
      %2352 = vmatpush1.bf16.msra.mxu0 %v1600
      %2353 = vmatprep.subr.bf16.mxu0 %v1611
      %2354 = vmatpush1.bf16.msra.mxu0 %v1610
      %2355 = vmatprep.subr.bf16.mxu0 %v1621
      %2356 = vmatpush1.bf16.msra.mxu0 %v1620
      %2357 = vmatprep.subr.bf16.mxu0 %v1631
      %2358 = vmatpush1.bf16.msra.mxu0 %v1630
      %2359 = vmatprep.subr.bf16.mxu0 %v1641
      %2360 = vmatpush1.bf16.msra.mxu0 %v1640
      %2361 = vmatprep.subr.bf16.mxu0 %v1651
      %2362 = vmatpush1.bf16.msra.mxu0 %v1650
      %2363 = vmatprep.subr.bf16.mxu0 %v1661
      %2364 = vmatpush1.bf16.msra.mxu0 %v1660
      %2365 = vmatprep.subr.bf16.mxu0 %v1671
      %2366 = vmatpush1.bf16.msra.mxu0 %v1670
      %2367 = vmatprep.subr.bf16.mxu0 %v1681
      %2368 = vmatpush1.bf16.msra.mxu0 %v1680
      %2369 = vmatprep.subr.bf16.mxu0 %v1691
      %2370 = vmatpush1.bf16.msra.mxu0 %v1690
      %2371 = vmatprep.subr.bf16.mxu0 %v1701
      %2372 = vmatpush1.bf16.msra.mxu0 %v1700
      %2373 = vmatprep.subr.bf16.mxu0 %v1711
      %2374 = vmatpush1.bf16.msra.mxu0 %v1710
      %2375 = vmatprep.subr.bf16.mxu0 %v1721
      %2376 = vmatpush1.bf16.msra.mxu0 %v1720
      %2377 = vmatprep.mubr.bf16.mxu0 %v439
      %2378 = vmatmul.mubr.bf16.gmra.mrb[0].mxu0 %v438
      %v2379 = vpop.f32.mrb[0].mxu0
      %v2380 = vadd.f32 %v2337, %v2379
      %v2381 = vpop.f32.mrb[0].mxu0
      %v2382 = vadd.f32 %v2339, %v2381
      %v2383 = vpop.f32.mrb[0].mxu0
      %v2384 = vadd.f32 %v2341, %v2383
      %v2385 = vpop.f32.mrb[0].mxu0
      %v2386 = vadd.f32 %v2343, %v2385
      %2387 = vdwg.mxu0
      %2388 = vmatprep.subr.bf16.mxu0 %v1413
      %2389 = vmatpush1.bf16.msra.mxu0 %v1412
      %2390 = vmatprep.subr.bf16.mxu0 %v1423
      %2391 = vmatpush1.bf16.msra.mxu0 %v1422
      %2392 = vmatprep.subr.bf16.mxu0 %v1433
      %2393 = vmatpush1.bf16.msra.mxu0 %v1432
      %2394 = vmatprep.subr.bf16.mxu0 %v1443
      %2395 = vmatpush1.bf16.msra.mxu0 %v1442
      %2396 = vmatprep.subr.bf16.mxu0 %v1453
      %2397 = vmatpush1.bf16.msra.mxu0 %v1452
      %2398 = vmatprep.subr.bf16.mxu0 %v1463
      %2399 = vmatpush1.bf16.msra.mxu0 %v1462
      %2400 = vmatprep.subr.bf16.mxu0 %v1473
      %2401 = vmatpush1.bf16.msra.mxu0 %v1472
      %2402 = vmatprep.subr.bf16.mxu0 %v1483
      %2403 = vmatpush1.bf16.msra.mxu0 %v1482
      %2404 = vmatprep.subr.bf16.mxu0 %v1493
      %2405 = vmatpush1.bf16.msra.mxu0 %v1492
      %2406 = vmatprep.subr.bf16.mxu0 %v1503
      %2407 = vmatpush1.bf16.msra.mxu0 %v1502
      %2408 = vmatprep.subr.bf16.mxu0 %v1513
      %2409 = vmatpush1.bf16.msra.mxu0 %v1512
      %2410 = vmatprep.subr.bf16.mxu0 %v1523
      %2411 = vmatpush1.bf16.msra.mxu0 %v1522
      %2412 = vmatprep.subr.bf16.mxu0 %v1533
      %2413 = vmatpush1.bf16.msra.mxu0 %v1532
      %2414 = vmatprep.subr.bf16.mxu0 %v1543
      %2415 = vmatpush1.bf16.msra.mxu0 %v1542
      %2416 = vmatprep.subr.bf16.mxu0 %v1553
      %2417 = vmatpush1.bf16.msra.mxu0 %v1552
      %2418 = vmatprep.subr.bf16.mxu0 %v1563
      %2419 = vmatpush1.bf16.msra.mxu0 %v1562
      %2420 = vmatprep.mubr.bf16.mxu0 %v437
      %2421 = vmatmul.mubr.bf16.gmra.mrb[0].mxu0 %v436
      %v2422 = vpop.f32.mrb[0].mxu0
      %v2423 = vadd.f32 0.0, %v2422
      %v2424 = vpop.f32.mrb[0].mxu0
      %v2425 = vadd.f32 0.0, %v2424
      %v2426 = vpop.f32.mrb[0].mxu0
      %v2427 = vadd.f32 0.0, %v2426
      %v2428 = vpop.f32.mrb[0].mxu0
      %v2429 = vadd.f32 0.0, %v2428
      %2430 = vdwg.mxu0
      %2431 = vmatprep.subr.bf16.mxu0 %v1573
      %2432 = vmatpush1.bf16.msra.mxu0 %v1572
      %2433 = vmatprep.subr.bf16.mxu0 %v1583
      %2434 = vmatpush1.bf16.msra.mxu0 %v1582
      %2435 = vmatprep.subr.bf16.mxu0 %v1593
      %2436 = vmatpush1.bf16.msra.mxu0 %v1592
      %2437 = vmatprep.subr.bf16.mxu0 %v1603
      %2438 = vmatpush1.bf16.msra.mxu0 %v1602
      %2439 = vmatprep.subr.bf16.mxu0 %v1613
      %2440 = vmatpush1.bf16.msra.mxu0 %v1612
      %2441 = vmatprep.subr.bf16.mxu0 %v1623
      %2442 = vmatpush1.bf16.msra.mxu0 %v1622
      %2443 = vmatprep.subr.bf16.mxu0 %v1633
      %2444 = vmatpush1.bf16.msra.mxu0 %v1632
      %2445 = vmatprep.subr.bf16.mxu0 %v1643
      %2446 = vmatpush1.bf16.msra.mxu0 %v1642
      %2447 = vmatprep.subr.bf16.mxu0 %v1653
      %2448 = vmatpush1.bf16.msra.mxu0 %v1652
      %2449 = vmatprep.subr.bf16.mxu0 %v1663
      %2450 = vmatpush1.bf16.msra.mxu0 %v1662
      %2451 = vmatprep.subr.bf16.mxu0 %v1673
      %2452 = vmatpush1.bf16.msra.mxu0 %v1672
      %2453 = vmatprep.subr.bf16.mxu0 %v1683
      %2454 = vmatpush1.bf16.msra.mxu0 %v1682
      %2455 = vmatprep.subr.bf16.mxu0 %v1693
      %2456 = vmatpush1.bf16.msra.mxu0 %v1692
      %2457 = vmatprep.subr.bf16.mxu0 %v1703
      %2458 = vmatpush1.bf16.msra.mxu0 %v1702
      %2459 = vmatprep.subr.bf16.mxu0 %v1713
      %2460 = vmatpush1.bf16.msra.mxu0 %v1712
      %2461 = vmatprep.subr.bf16.mxu0 %v1723
      %2462 = vmatpush1.bf16.msra.mxu0 %v1722
      %2463 = vmatprep.mubr.bf16.mxu0 %v439
      %2464 = vmatmul.mubr.bf16.gmra.mrb[0].mxu0 %v438
      %v2465 = vpop.f32.mrb[0].mxu0
      %v2466 = vadd.f32 %v2423, %v2465
      %v2467 = vpop.f32.mrb[0].mxu0
      %v2468 = vadd.f32 %v2425, %v2467
      %v2469 = vpop.f32.mrb[0].mxu0
      %v2470 = vadd.f32 %v2427, %v2469
      %v2471 = vpop.f32.mrb[0].mxu0
      %v2472 = vadd.f32 %v2429, %v2471
      %2473 = vdwg.mxu0
      %v2474 = vadd.f32 %v76, %v2122
      %v2475 = vadd.f32 %v77, %v2124
      %v2476 = vadd.f32 %v78, %v2208
      %v2477 = vadd.f32 %v79, %v2210
      %v2478 = vadd.f32 %v80, %v2294
      %v2479 = vadd.f32 %v81, %v2296
      %v2480 = vadd.f32 %v82, %v2380
      %v2481 = vadd.f32 %v83, %v2382
      %v2482 = vadd.f32 %v84, %v2466
      %v2483 = vadd.f32 %v85, %v2468
      %v2484 = vadd.f32 %v86, %v2126
      %v2485 = vadd.f32 %v87, %v2128
      %v2486 = vadd.f32 %v88, %v2212
      %v2487 = vadd.f32 %v89, %v2214
      %v2488 = vadd.f32 %v90, %v2298
      %v2489 = vadd.f32 %v91, %v2300
      %v2490 = vadd.f32 %v92, %v2384
      %v2491 = vadd.f32 %v93, %v2386
      %v2492 = vadd.f32 %v94, %v2470
      %v2493 = vadd.f32 %v95, %v2472
      %2494 = vst [vmem:[%s4] sm:$0xff] %v2474
      %2495 = vst [vmem:[%s4 + $0x8] sm:$0xff] %v2475
      %2496 = vst [vmem:[%s4 + $0x10] sm:$0xff] %v2476
      %2497 = vst [vmem:[%s4 + $0x18] sm:$0xff] %v2477
      %2498 = vst [vmem:[%s4 + $0x20] sm:$0xff] %v2478
      %2499 = vst [vmem:[%s4 + $0x28] sm:$0xff] %v2479
      %2500 = vst [vmem:[%s4 + $0x30] sm:$0xff] %v2480
      %2501 = vst [vmem:[%s4 + $0x38] sm:$0xff] %v2481
      %2502 = vst [vmem:[%s4 + $0x40] sm:$0xff] %v2482
      %2503 = vst [vmem:[%s4 + $0x48] sm:$0xff] %v2483
      %2504 = vst [vmem:[%s4 + $0x50] sm:$0xff] %v2484
      %2505 = vst [vmem:[%s4 + $0x58] sm:$0xff] %v2485
      %2506 = vst [vmem:[%s4 + $0x60] sm:$0xff] %v2486
      %2507 = vst [vmem:[%s4 + $0x68] sm:$0xff] %v2487
      %2508 = vst [vmem:[%s4 + $0x70] sm:$0xff] %v2488
      %2509 = vst [vmem:[%s4 + $0x78] sm:$0xff] %v2489
      %2510 = vst [vmem:[%s4 + $0x80] sm:$0xff] %v2490
      %2511 = vst [vmem:[%s4 + $0x88] sm:$0xff] %v2491
      %2512 = vst [vmem:[%s4 + $0x90] sm:$0xff] %v2492
      %2513 = vst [vmem:[%s4 + $0x98] sm:$0xff] %v2493
    $region21: #{_matmul_pallas.1} parent=1 // pred_fallthru
      _
    // Predicated region
    $region22: #{_matmul_pallas.1} parent=1 // pred_check
      _
    $region23: #{_matmul_pallas.1} parent=1 // pred_check_branch
      %2515 = sbr.rel (0) target = $region25
    $region24: #{_matmul_pallas.1} parent=1 // pred_region
      _
    $region25: #{_matmul_pallas.1} parent=1 // pred_fallthru
      _
    // Predicated region
    $region26: #{_matmul_pallas.1} parent=1 // pred_check
      _
    $region27: #{_matmul_pallas.1} parent=1 // pred_check_branch
      %2517 = sbr.rel (0) target = $region29
    $region28: #{_matmul_pallas.1} parent=1 // pred_region
      _
    $region29: #{_matmul_pallas.1} parent=1 // pred_fallthru
      _
    %2518 = vsyncpa [#allocation6], 1

</llo_original>
